<compile_context>
chip_gen: v7x
topology: tpu7x:2x2x1
jax: 0.10.0
libtpu: 0.0.40
codegen_flags: <defaults>
</compile_context>

<pallas_src>
import functools

import jax
import jax.numpy as jnp
import numpy as np
from jax.experimental import pallas as pl
from jax.experimental.pallas import tpu as pltpu

# --------------------------- model configuration ---------------------------
D_IN = 2          # in_proj: Linear(2, d_model)
D_MODEL = 2       # module default
N_HEAD = 1        # module default
DIM_FF = 8        # module default
D_OUT = 9         # out_proj: Linear(d_model, 9)
HEAD_DIM = D_MODEL // N_HEAD
LN_EPS = 1e-5
LANE = 128        # lane width; batch tiles are multiples of this
NEG_INF = float("-inf")
# NOTE: num_layers=1 (the module default) is implemented; deeper stacks would
# be Python-unrolled copies of the attention+FFN block inside the kernel.
# TODO(synk): for very long S, stream keys flash-style instead of holding the
# (S, S, B_tile) score planes in vregs/VMEM.

_SCALAR_ORDER = [
    "w_in", "b_in", "wq", "bq", "wk", "bk", "wv", "bv", "wo", "bo",
    "g1", "be1", "w1", "b1", "w2", "b2", "g2", "be2", "w_out", "b_out",
]


# ----------------------- host-side parameter packing -----------------------
def pack_scalars(p):
    """Flatten every tiny weight/bias into one f32 vector (lives in SMEM).

    Folds 1/sqrt(head_dim) into wq/bq (exact).  Returns (flat, offs) where
    offs[name] = (flat_offset, n_cols) with row-major layout per parameter.
    """
    scale = 1.0 / np.sqrt(HEAD_DIM)
    folded = dict(p)
    folded["wq"] = p["wq"] * scale
    folded["bq"] = p["bq"] * scale
    offs, chunks, off = {}, [], 0
    for name in _SCALAR_ORDER:
        a = np.asarray(folded[name], np.float32)
        a = a.reshape(a.shape[0], -1)
        offs[name] = (off, a.shape[1])
        chunks.append(a.reshape(-1))
        off += a.size
    return jnp.asarray(np.concatenate(chunks), jnp.float32), offs


# ------------------------------ Pallas kernel ------------------------------
def _transformer_kernel(scal_ref, x_ref, aux_ref, o_ref, *, offs):
    """Batch on lanes: every activation is an (S, B_tile) lane-dense plane."""

    def sc(name, i=0, j=0):
        off, ncol = offs[name]
        return scal_ref[off + i * ncol + j]          # scalar read from SMEM

    x0 = x_ref[0]                                    # (S, Bt)
    x1 = x_ref[1]

    # ---- in_proj: K=2 contraction -> lane-dense VPU FMAs ----
    h0 = x0 * sc("w_in", 0, 0) + x1 * sc("w_in", 1, 0) + sc("b_in", 0, 0)
    h1 = x0 * sc("w_in", 0, 1) + x1 * sc("w_in", 1, 1) + sc("b_in", 0, 1)

    # ---- RoPE on the attention input (rotate_half for d=2 is (-x1, x0)) ----
    cos0 = aux_ref[0]
    cos1 = aux_ref[1]
    sin0 = aux_ref[2]
    sin1 = aux_ref[3]
    pos = aux_ref[4]                                 # (S, Bt), value = seq index
    r0 = h0 * cos0 - h1 * sin0
    r1 = h1 * cos1 + h0 * sin1

    # ---- q/k/v projections (1/sqrt(head_dim) already folded into wq/bq) ----
    q0 = r0 * sc("wq", 0, 0) + r1 * sc("wq", 1, 0) + sc("bq", 0, 0)
    q1 = r0 * sc("wq", 0, 1) + r1 * sc("wq", 1, 1) + sc("bq", 0, 1)
    k0 = r0 * sc("wk", 0, 0) + r1 * sc("wk", 1, 0) + sc("bk", 0, 0)
    k1 = r0 * sc("wk", 0, 1) + r1 * sc("wk", 1, 1) + sc("bk", 0, 1)
    v0 = h0 * sc("wv", 0, 0) + h1 * sc("wv", 1, 0) + sc("bv", 0, 0)
    v1 = h0 * sc("wv", 0, 1) + h1 * sc("wv", 1, 1) + sc("bv", 0, 1)

    # ---- causal attention, all VPU/XLU/EUP: scores[q_pos, k_pos, b] ----
    scores = q0[:, None, :] * k0[None, :, :] + q1[:, None, :] * k1[None, :, :]
    causal = pos[None, :, :] <= pos[:, None, :]      # k_pos <= q_pos
    scores = jnp.where(causal, scores, NEG_INF)
    m = jnp.max(scores, axis=1, keepdims=True)       # (S, 1, Bt)
    e = jnp.exp(scores - m)
    denom = jnp.sum(e, axis=1, keepdims=True)
    r = pl.reciprocal(denom, approx=True)            # EUP vrcp (free slot)
    r = r * (2.0 - denom * r)                        # one Newton step -> <1e-7 rel
    prob = e * r
    ctx0 = jnp.sum(prob * v0[None, :, :], axis=1)    # (S, Bt)
    ctx1 = jnp.sum(prob * v1[None, :, :], axis=1)

    a0 = ctx0 * sc("wo", 0, 0) + ctx1 * sc("wo", 1, 0) + sc("bo", 0, 0)
    a1 = ctx0 * sc("wo", 0, 1) + ctx1 * sc("wo", 1, 1) + sc("bo", 0, 1)

    # ---- residual + LayerNorm 1 (channel axis = the two planes) ----
    y0 = h0 + a0
    y1 = h1 + a1
    mu = 0.5 * (y0 + y1)
    d0 = y0 - mu
    d1 = y1 - mu
    inv = jax.lax.rsqrt(0.5 * (d0 * d0 + d1 * d1) + LN_EPS)
    h0 = d0 * inv * sc("g1", 0, 0) + sc("be1", 0, 0)
    h1 = d1 * inv * sc("g1", 0, 1) + sc("be1", 0, 1)

    # ---- FFN: Linear(2,8) + ReLU + Linear(8,2), unrolled VPU FMAs ----
    ffn0 = jnp.zeros_like(h0)
    ffn1 = jnp.zeros_like(h1)
    for j in range(DIM_FF):
        fj = jnp.maximum(
            h0 * sc("w1", 0, j) + h1 * sc("w1", 1, j) + sc("b1", 0, j), 0.0)
        ffn0 = ffn0 + fj * sc("w2", j, 0)
        ffn1 = ffn1 + fj * sc("w2", j, 1)
    ffn0 = ffn0 + sc("b2", 0, 0)
    ffn1 = ffn1 + sc("b2", 0, 1)

    # ---- residual + LayerNorm 2 ----
    y0 = h0 + ffn0
    y1 = h1 + ffn1
    mu = 0.5 * (y0 + y1)
    d0 = y0 - mu
    d1 = y1 - mu
    inv = jax.lax.rsqrt(0.5 * (d0 * d0 + d1 * d1) + LN_EPS)
    h0 = d0 * inv * sc("g2", 0, 0) + sc("be2", 0, 0)
    h1 = d1 * inv * sc("g2", 0, 1) + sc("be2", 0, 1)

    # ---- out_proj: 9 lane-dense (S, Bt) planes -> unmasked, unpadded stores ----
    for c in range(D_OUT):
        o_ref[c] = (h0 * sc("w_out", 0, c) + h1 * sc("w_out", 1, c)
                    + sc("b_out", 0, c))


# ------------------------------ host wrapper --------------------------------
def _pick_batch_tile(batch):
    """Lane tile = multiple of 128.  Keep >=2 grid steps when the batch allows
    it (v7x has 2 TensorCores sharing the 'parallel' axis); cap at 512 lanes."""
    groups = -(-batch // LANE)
    if groups <= 1:
        return LANE
    return min(max(groups // 2, 1), 4) * LANE


def causal_transformer_rope(x, scal, offs, cos, sin, *, batch_tile=None):
    """x: (B, S, 2) f32; (scal, offs) from pack_scalars; cos/sin: (>=S, 2).

    Returns (B, S, 9) f32.
    """
    B, S, _ = x.shape
    bt = batch_tile or _pick_batch_tile(B)
    n_steps = -(-B // bt)
    bp = n_steps * bt

    # Batch onto the 128-lane axis: (B, S, 2) -> per-channel planes (2, S, Bp).
    x_t = jnp.transpose(x, (2, 1, 0))
    if bp != B:
        x_t = jnp.pad(x_t, ((0, 0), (0, 0), (0, bp - B)))

    # Aux VMEM planes (constant block index -> fetched once, stays resident):
    # cos0, cos1, sin0, sin1, seq-position, pre-broadcast over the lane tile.
    pos = jnp.arange(S, dtype=jnp.float32)
    aux = jnp.stack([cos[:S, 0], cos[:S, 1], sin[:S, 0], sin[:S, 1], pos])
    aux = jnp.broadcast_to(aux[:, :, None], (5, S, bt)).astype(jnp.float32)

    kernel = functools.partial(_transformer_kernel, offs=offs)
    out_t = pl.pallas_call(
        kernel,
        out_shape=jax.ShapeDtypeStruct((D_OUT, S, bp), jnp.float32),
        grid_spec=pltpu.PrefetchScalarGridSpec(
            num_scalar_prefetch=1,                  # scal -> SMEM
            grid=(n_steps,),
            in_specs=[
                pl.BlockSpec((D_IN, S, bt), lambda b, scal_ref: (0, 0, b)),
                pl.BlockSpec((5, S, bt), lambda b, scal_ref: (0, 0, 0)),
            ],
            out_specs=pl.BlockSpec((D_OUT, S, bt), lambda b, scal_ref: (0, 0, b)),
        ),
        compiler_params=pltpu.CompilerParams(
            dimension_semantics=("parallel",),
        ),
    )(scal, x_t, aux)

    return jnp.transpose(out_t, (2, 1, 0))[:B]      # (B, S, 9)


# ------------------------- deterministic parameter init ---------------------
def make_params(key, seq_len):
    ks = jax.random.split(key, 16)
    f = jnp.float32
    s = 0.5

    inv_freq = 1.0 / (10000.0 ** (jnp.arange(0, D_MODEL, 2, dtype=f) / D_MODEL))
    pos = jnp.arange(seq_len, dtype=f)
    sinus = pos[:, None] * inv_freq[None, :]                 # (S, D/2)
    cos = jnp.repeat(jnp.cos(sinus), 2, axis=-1)             # (S, D)
    sin = jnp.repeat(jnp.sin(sinus), 2, axis=-1)             # (S, D)

    return {
        "cos": cos, "sin": sin,
        "w_in": jax.random.normal(ks[0], (D_IN, D_MODEL), f) * s,
        "b_in": jax.random.normal(ks[1], (1, D_MODEL), f) * 0.1,
        "wq": jax.random.normal(ks[2], (D_MODEL, D_MODEL), f) * s,
        "bq": jax.random.normal(ks[3], (1, D_MODEL), f) * 0.1,
        "wk": jax.random.normal(ks[4], (D_MODEL, D_MODEL), f) * s,
        "bk": jax.random.normal(ks[5], (1, D_MODEL), f) * 0.1,
        "wv": jax.random.normal(ks[6], (D_MODEL, D_MODEL), f) * s,
        "bv": jax.random.normal(ks[7], (1, D_MODEL), f) * 0.1,
        "wo": jax.random.normal(ks[8], (D_MODEL, D_MODEL), f) * s,
        "bo": jax.random.normal(ks[9], (1, D_MODEL), f) * 0.1,
        "g1": jnp.ones((1, D_MODEL), f), "be1": jnp.zeros((1, D_MODEL), f),
        "w1": jax.random.normal(ks[10], (D_MODEL, DIM_FF), f) * s,
        "b1": jax.random.normal(ks[11], (1, DIM_FF), f) * 0.1,
        "w2": jax.random.normal(ks[12], (DIM_FF, D_MODEL), f) * s,
        "b2": jax.random.normal(ks[13], (1, D_MODEL), f) * 0.1,
        "g2": jnp.ones((1, D_MODEL), f), "be2": jnp.zeros((1, D_MODEL), f),
        "w_out": jax.random.normal(ks[14], (D_MODEL, D_OUT), f) * s,
        "b_out": jax.random.normal(ks[15], (1, D_OUT), f) * 0.1,
    }


# ------------------------------ pure-JAX reference ---------------------------
def reference(x, p):
    scale = 1.0 / np.sqrt(HEAD_DIM)

    def rotate_half(t):
        t0 = t[..., 0::2]
        t1 = t[..., 1::2]
        return jnp.stack((-t1, t0), axis=-1).reshape(t.shape)

    h = x @ p["w_in"] + p["b_in"]
    rot_h = h * p["cos"] + rotate_half(h) * p["sin"]
    q = rot_h @ p["wq"] + p["bq"]
    k = rot_h @ p["wk"] + p["bk"]
    v = h @ p["wv"] + p["bv"]
    S = x.shape[1]
    scores = jnp.einsum("bqd,bkd->bqk", q, k) * scale
    mask = jnp.triu(jnp.full((S, S), -jnp.inf, jnp.float32), k=1)
    scores = scores + mask[None]
    w = jax.nn.softmax(scores, axis=-1)
    attn = jnp.einsum("bqk,bkd->bqd", w, v) @ p["wo"] + p["bo"]

    def ln(y, g, b):
        mu = jnp.mean(y, axis=-1, keepdims=True)
        var = jnp.mean((y - mu) ** 2, axis=-1, keepdims=True)
        return (y - mu) * jax.lax.rsqrt(var + LN_EPS) * g + b

    h = ln(h + attn, p["g1"], p["be1"])
    f = jnp.maximum(h @ p["w1"] + p["b1"], 0.0) @ p["w2"] + p["b2"]
    h = ln(h + f, p["g2"], p["be2"])
    return h @ p["w_out"] + p["b_out"]


# ------------------------------------ main -----------------------------------
if __name__ == "__main__":
    B, S = 2, 8
    key = jax.random.PRNGKey(0)
    kx, kp = jax.random.split(key)
    x = jax.random.normal(kx, (B, S, D_IN), jnp.float32)
    params = make_params(kp, S)
    scal, offs = pack_scalars(params)

    out = causal_transformer_rope(x, scal, offs, params["cos"], params["sin"])
    out = jax.block_until_ready(out)

    ref = jax.block_until_ready(reference(x, params))
    assert out.shape == (B, S, D_OUT)
    np.testing.assert_allclose(np.asarray(out), np.asarray(ref), rtol=1e-5, atol=1e-5)
    print("KERNEL_OK")
</pallas_src>

<mosaic_0001>
module attributes {stable_mosaic.version = 11 : i64} {
  func.func @_transformer_kernel(%arg0: i32, %arg1: memref<107xf32, #tpu.memory_space<smem>>, %arg2: memref<2x8x128xf32, #tpu.memory_space<vmem>>, %arg3: memref<5x8x128xf32, #tpu.memory_space<vmem>>, %arg4: memref<9x8x128xf32, #tpu.memory_space<vmem>>) attributes {dimension_semantics = [#tpu.dimension_semantics<parallel>], iteration_bounds = array<i64: 1>, scalar_prefetch = 1 : i64, scratch_operands = 0 : i64, tpu.core_type = #tpu.core_type<tc>, window_params = [{transform_indices = @transform_0, window_bounds = array<i64: 2, 8, 128>}, {pipeline_mode = #tpu.pipeline_mode<synchronous>, transform_indices = @transform_1, window_bounds = array<i64: 5, 8, 128>}, {transform_indices = @transform_2, window_bounds = array<i64: 9, 8, 128>}]} {
    %c0 = arith.constant 0 : index
    %c0_0 = arith.constant 0 : index
    %c0_1 = arith.constant 0 : index
    %0 = vector.load %arg2[%c0, %c0_0, %c0_1] : memref<2x8x128xf32, #tpu.memory_space<vmem>>, vector<1x8x128xf32>
    %1 = vector.shape_cast %0 : vector<1x8x128xf32> to vector<8x128xf32>
    %c1 = arith.constant 1 : index
    %c0_2 = arith.constant 0 : index
    %c0_3 = arith.constant 0 : index
    %2 = vector.load %arg2[%c1, %c0_2, %c0_3] : memref<2x8x128xf32, #tpu.memory_space<vmem>>, vector<1x8x128xf32>
    %3 = vector.shape_cast %2 : vector<1x8x128xf32> to vector<8x128xf32>
    %c0_4 = arith.constant 0 : index
    %4 = memref.load %arg1[%c0_4] : memref<107xf32, #tpu.memory_space<smem>>
    %5 = vector.broadcast %4 : f32 to vector<8x128xf32>
    %6 = arith.mulf %1, %5 : vector<8x128xf32>
    %c2 = arith.constant 2 : index
    %7 = memref.load %arg1[%c2] : memref<107xf32, #tpu.memory_space<smem>>
    %8 = vector.broadcast %7 : f32 to vector<8x128xf32>
    %9 = arith.mulf %3, %8 : vector<8x128xf32>
    %10 = arith.addf %6, %9 : vector<8x128xf32>
    %c4 = arith.constant 4 : index
    %11 = memref.load %arg1[%c4] : memref<107xf32, #tpu.memory_space<smem>>
    %12 = vector.broadcast %11 : f32 to vector<8x128xf32>
    %13 = arith.addf %10, %12 : vector<8x128xf32>
    %c1_5 = arith.constant 1 : index
    %14 = memref.load %arg1[%c1_5] : memref<107xf32, #tpu.memory_space<smem>>
    %15 = vector.broadcast %14 : f32 to vector<8x128xf32>
    %16 = arith.mulf %1, %15 : vector<8x128xf32>
    %c3 = arith.constant 3 : index
    %17 = memref.load %arg1[%c3] : memref<107xf32, #tpu.memory_space<smem>>
    %18 = vector.broadcast %17 : f32 to vector<8x128xf32>
    %19 = arith.mulf %3, %18 : vector<8x128xf32>
    %20 = arith.addf %16, %19 : vector<8x128xf32>
    %c5 = arith.constant 5 : index
    %21 = memref.load %arg1[%c5] : memref<107xf32, #tpu.memory_space<smem>>
    %22 = vector.broadcast %21 : f32 to vector<8x128xf32>
    %23 = arith.addf %20, %22 : vector<8x128xf32>
    %c0_6 = arith.constant 0 : index
    %c0_7 = arith.constant 0 : index
    %c0_8 = arith.constant 0 : index
    %24 = vector.load %arg3[%c0_6, %c0_7, %c0_8] : memref<5x8x128xf32, #tpu.memory_space<vmem>>, vector<1x8x128xf32>
    %25 = vector.shape_cast %24 : vector<1x8x128xf32> to vector<8x128xf32>
    %c1_9 = arith.constant 1 : index
    %c0_10 = arith.constant 0 : index
    %c0_11 = arith.constant 0 : index
    %26 = vector.load %arg3[%c1_9, %c0_10, %c0_11] : memref<5x8x128xf32, #tpu.memory_space<vmem>>, vector<1x8x128xf32>
    %27 = vector.shape_cast %26 : vector<1x8x128xf32> to vector<8x128xf32>
    %c2_12 = arith.constant 2 : index
    %c0_13 = arith.constant 0 : index
    %c0_14 = arith.constant 0 : index
    %28 = vector.load %arg3[%c2_12, %c0_13, %c0_14] : memref<5x8x128xf32, #tpu.memory_space<vmem>>, vector<1x8x128xf32>
    %29 = vector.shape_cast %28 : vector<1x8x128xf32> to vector<8x128xf32>
    %c3_15 = arith.constant 3 : index
    %c0_16 = arith.constant 0 : index
    %c0_17 = arith.constant 0 : index
    %30 = vector.load %arg3[%c3_15, %c0_16, %c0_17] : memref<5x8x128xf32, #tpu.memory_space<vmem>>, vector<1x8x128xf32>
    %31 = vector.shape_cast %30 : vector<1x8x128xf32> to vector<8x128xf32>
    %c4_18 = arith.constant 4 : index
    %c0_19 = arith.constant 0 : index
    %c0_20 = arith.constant 0 : index
    %32 = vector.load %arg3[%c4_18, %c0_19, %c0_20] : memref<5x8x128xf32, #tpu.memory_space<vmem>>, vector<1x8x128xf32>
    %33 = vector.shape_cast %32 : vector<1x8x128xf32> to vector<8x128xf32>
    %34 = arith.mulf %13, %25 : vector<8x128xf32>
    %35 = arith.mulf %23, %29 : vector<8x128xf32>
    %36 = arith.subf %34, %35 : vector<8x128xf32>
    %37 = arith.mulf %23, %27 : vector<8x128xf32>
    %38 = arith.mulf %13, %31 : vector<8x128xf32>
    %39 = arith.addf %37, %38 : vector<8x128xf32>
    %c6 = arith.constant 6 : index
    %40 = memref.load %arg1[%c6] : memref<107xf32, #tpu.memory_space<smem>>
    %41 = vector.broadcast %40 : f32 to vector<8x128xf32>
    %42 = arith.mulf %36, %41 : vector<8x128xf32>
    %c8 = arith.constant 8 : index
    %43 = memref.load %arg1[%c8] : memref<107xf32, #tpu.memory_space<smem>>
    %44 = vector.broadcast %43 : f32 to vector<8x128xf32>
    %45 = arith.mulf %39, %44 : vector<8x128xf32>
    %46 = arith.addf %42, %45 : vector<8x128xf32>
    %c10 = arith.constant 10 : index
    %47 = memref.load %arg1[%c10] : memref<107xf32, #tpu.memory_space<smem>>
    %48 = vector.broadcast %47 : f32 to vector<8x128xf32>
    %49 = arith.addf %46, %48 : vector<8x128xf32>
    %c7 = arith.constant 7 : index
    %50 = memref.load %arg1[%c7] : memref<107xf32, #tpu.memory_space<smem>>
    %51 = vector.broadcast %50 : f32 to vector<8x128xf32>
    %52 = arith.mulf %36, %51 : vector<8x128xf32>
    %c9 = arith.constant 9 : index
    %53 = memref.load %arg1[%c9] : memref<107xf32, #tpu.memory_space<smem>>
    %54 = vector.broadcast %53 : f32 to vector<8x128xf32>
    %55 = arith.mulf %39, %54 : vector<8x128xf32>
    %56 = arith.addf %52, %55 : vector<8x128xf32>
    %c11 = arith.constant 11 : index
    %57 = memref.load %arg1[%c11] : memref<107xf32, #tpu.memory_space<smem>>
    %58 = vector.broadcast %57 : f32 to vector<8x128xf32>
    %59 = arith.addf %56, %58 : vector<8x128xf32>
    %c12 = arith.constant 12 : index
    %60 = memref.load %arg1[%c12] : memref<107xf32, #tpu.memory_space<smem>>
    %61 = vector.broadcast %60 : f32 to vector<8x128xf32>
    %62 = arith.mulf %36, %61 : vector<8x128xf32>
    %c14 = arith.constant 14 : index
    %63 = memref.load %arg1[%c14] : memref<107xf32, #tpu.memory_space<smem>>
    %64 = vector.broadcast %63 : f32 to vector<8x128xf32>
    %65 = arith.mulf %39, %64 : vector<8x128xf32>
    %66 = arith.addf %62, %65 : vector<8x128xf32>
    %c16 = arith.constant 16 : index
    %67 = memref.load %arg1[%c16] : memref<107xf32, #tpu.memory_space<smem>>
    %68 = vector.broadcast %67 : f32 to vector<8x128xf32>
    %69 = arith.addf %66, %68 : vector<8x128xf32>
    %c13 = arith.constant 13 : index
    %70 = memref.load %arg1[%c13] : memref<107xf32, #tpu.memory_space<smem>>
    %71 = vector.broadcast %70 : f32 to vector<8x128xf32>
    %72 = arith.mulf %36, %71 : vector<8x128xf32>
    %c15 = arith.constant 15 : index
    %73 = memref.load %arg1[%c15] : memref<107xf32, #tpu.memory_space<smem>>
    %74 = vector.broadcast %73 : f32 to vector<8x128xf32>
    %75 = arith.mulf %39, %74 : vector<8x128xf32>
    %76 = arith.addf %72, %75 : vector<8x128xf32>
    %c17 = arith.constant 17 : index
    %77 = memref.load %arg1[%c17] : memref<107xf32, #tpu.memory_space<smem>>
    %78 = vector.broadcast %77 : f32 to vector<8x128xf32>
    %79 = arith.addf %76, %78 : vector<8x128xf32>
    %c18 = arith.constant 18 : index
    %80 = memref.load %arg1[%c18] : memref<107xf32, #tpu.memory_space<smem>>
    %81 = vector.broadcast %80 : f32 to vector<8x128xf32>
    %82 = arith.mulf %13, %81 : vector<8x128xf32>
    %c20 = arith.constant 20 : index
    %83 = memref.load %arg1[%c20] : memref<107xf32, #tpu.memory_space<smem>>
    %84 = vector.broadcast %83 : f32 to vector<8x128xf32>
    %85 = arith.mulf %23, %84 : vector<8x128xf32>
    %86 = arith.addf %82, %85 : vector<8x128xf32>
    %c22 = arith.constant 22 : index
    %87 = memref.load %arg1[%c22] : memref<107xf32, #tpu.memory_space<smem>>
    %88 = vector.broadcast %87 : f32 to vector<8x128xf32>
    %89 = arith.addf %86, %88 : vector<8x128xf32>
    %c19 = arith.constant 19 : index
    %90 = memref.load %arg1[%c19] : memref<107xf32, #tpu.memory_space<smem>>
    %91 = vector.broadcast %90 : f32 to vector<8x128xf32>
    %92 = arith.mulf %13, %91 : vector<8x128xf32>
    %c21 = arith.constant 21 : index
    %93 = memref.load %arg1[%c21] : memref<107xf32, #tpu.memory_space<smem>>
    %94 = vector.broadcast %93 : f32 to vector<8x128xf32>
    %95 = arith.mulf %23, %94 : vector<8x128xf32>
    %96 = arith.addf %92, %95 : vector<8x128xf32>
    %c23 = arith.constant 23 : index
    %97 = memref.load %arg1[%c23] : memref<107xf32, #tpu.memory_space<smem>>
    %98 = vector.broadcast %97 : f32 to vector<8x128xf32>
    %99 = arith.addf %96, %98 : vector<8x128xf32>
    %100 = vector.shape_cast %49 : vector<8x128xf32> to vector<8x1x128xf32>
    %101 = vector.shape_cast %69 : vector<8x128xf32> to vector<1x8x128xf32>
    %102 = vector.broadcast %100 : vector<8x1x128xf32> to vector<8x8x128xf32>
    %103 = vector.broadcast %101 : vector<1x8x128xf32> to vector<8x8x128xf32>
    %104 = arith.mulf %102, %103 : vector<8x8x128xf32>
    %105 = vector.shape_cast %59 : vector<8x128xf32> to vector<8x1x128xf32>
    %106 = vector.shape_cast %79 : vector<8x128xf32> to vector<1x8x128xf32>
    %107 = vector.broadcast %105 : vector<8x1x128xf32> to vector<8x8x128xf32>
    %108 = vector.broadcast %106 : vector<1x8x128xf32> to vector<8x8x128xf32>
    %109 = arith.mulf %107, %108 : vector<8x8x128xf32>
    %110 = arith.addf %104, %109 : vector<8x8x128xf32>
    %111 = vector.shape_cast %33 : vector<8x128xf32> to vector<1x8x128xf32>
    %112 = vector.shape_cast %33 : vector<8x128xf32> to vector<8x1x128xf32>
    %113 = vector.broadcast %111 : vector<1x8x128xf32> to vector<8x8x128xf32>
    %114 = vector.broadcast %112 : vector<8x1x128xf32> to vector<8x8x128xf32>
    %115 = arith.cmpf ole, %113, %114 : vector<8x8x128xf32>
    %cst = arith.constant 0xFF800000 : f32
    %116 = vector.broadcast %cst : f32 to vector<8x8x128xf32>
    %117 = arith.select %115, %110, %116 : vector<8x8x128xi1>, vector<8x8x128xf32>
    %cst_21 = arith.constant dense<0xFF800000> : vector<8x128xf32>
    %118 = vector.multi_reduction <maximumf>, %117, %cst_21 [1] : vector<8x8x128xf32> to vector<8x128xf32>
    %119 = vector.shape_cast %118 : vector<8x128xf32> to vector<8x1x128xf32>
    %120 = vector.broadcast %119 : vector<8x1x128xf32> to vector<8x8x128xf32>
    %121 = arith.subf %117, %120 : vector<8x8x128xf32>
    %122 = math.exp %121 : vector<8x8x128xf32>
    %cst_22 = arith.constant dense<0.000000e+00> : vector<8x128xf32>
    %123 = vector.multi_reduction <add>, %122, %cst_22 [1] : vector<8x8x128xf32> to vector<8x128xf32>
    %124 = vector.shape_cast %123 : vector<8x128xf32> to vector<8x1x128xf32>
    %125 = tpu.reciprocal %124 {approx = true} : vector<8x1x128xf32> -> vector<8x1x128xf32>
    %126 = arith.mulf %124, %125 : vector<8x1x128xf32>
    %cst_23 = arith.constant 2.000000e+00 : f32
    %127 = vector.broadcast %cst_23 : f32 to vector<8x1x128xf32>
    %128 = arith.subf %127, %126 : vector<8x1x128xf32>
    %129 = arith.mulf %125, %128 : vector<8x1x128xf32>
    %130 = vector.broadcast %129 : vector<8x1x128xf32> to vector<8x8x128xf32>
    %131 = arith.mulf %122, %130 : vector<8x8x128xf32>
    %132 = vector.shape_cast %89 : vector<8x128xf32> to vector<1x8x128xf32>
    %133 = vector.broadcast %132 : vector<1x8x128xf32> to vector<8x8x128xf32>
    %134 = arith.mulf %131, %133 : vector<8x8x128xf32>
    %cst_24 = arith.constant dense<0.000000e+00> : vector<8x128xf32>
    %135 = vector.multi_reduction <add>, %134, %cst_24 [1] : vector<8x8x128xf32> to vector<8x128xf32>
    %136 = vector.shape_cast %99 : vector<8x128xf32> to vector<1x8x128xf32>
    %137 = vector.broadcast %136 : vector<1x8x128xf32> to vector<8x8x128xf32>
    %138 = arith.mulf %131, %137 : vector<8x8x128xf32>
    %cst_25 = arith.constant dense<0.000000e+00> : vector<8x128xf32>
    %139 = vector.multi_reduction <add>, %138, %cst_25 [1] : vector<8x8x128xf32> to vector<8x128xf32>
    %c24 = arith.constant 24 : index
    %140 = memref.load %arg1[%c24] : memref<107xf32, #tpu.memory_space<smem>>
    %141 = vector.broadcast %140 : f32 to vector<8x128xf32>
    %142 = arith.mulf %135, %141 : vector<8x128xf32>
    %c26 = arith.constant 26 : index
    %143 = memref.load %arg1[%c26] : memref<107xf32, #tpu.memory_space<smem>>
    %144 = vector.broadcast %143 : f32 to vector<8x128xf32>
    %145 = arith.mulf %139, %144 : vector<8x128xf32>
    %146 = arith.addf %142, %145 : vector<8x128xf32>
    %c28 = arith.constant 28 : index
    %147 = memref.load %arg1[%c28] : memref<107xf32, #tpu.memory_space<smem>>
    %148 = vector.broadcast %147 : f32 to vector<8x128xf32>
    %149 = arith.addf %146, %148 : vector<8x128xf32>
    %c25 = arith.constant 25 : index
    %150 = memref.load %arg1[%c25] : memref<107xf32, #tpu.memory_space<smem>>
    %151 = vector.broadcast %150 : f32 to vector<8x128xf32>
    %152 = arith.mulf %135, %151 : vector<8x128xf32>
    %c27 = arith.constant 27 : index
    %153 = memref.load %arg1[%c27] : memref<107xf32, #tpu.memory_space<smem>>
    %154 = vector.broadcast %153 : f32 to vector<8x128xf32>
    %155 = arith.mulf %139, %154 : vector<8x128xf32>
    %156 = arith.addf %152, %155 : vector<8x128xf32>
    %c29 = arith.constant 29 : index
    %157 = memref.load %arg1[%c29] : memref<107xf32, #tpu.memory_space<smem>>
    %158 = vector.broadcast %157 : f32 to vector<8x128xf32>
    %159 = arith.addf %156, %158 : vector<8x128xf32>
    %160 = arith.addf %13, %149 : vector<8x128xf32>
    %161 = arith.addf %23, %159 : vector<8x128xf32>
    %162 = arith.addf %160, %161 : vector<8x128xf32>
    %cst_26 = arith.constant 5.000000e-01 : f32
    %163 = vector.broadcast %cst_26 : f32 to vector<8x128xf32>
    %164 = arith.mulf %163, %162 : vector<8x128xf32>
    %165 = arith.subf %160, %164 : vector<8x128xf32>
    %166 = arith.subf %161, %164 : vector<8x128xf32>
    %167 = arith.mulf %165, %165 : vector<8x128xf32>
    %168 = arith.mulf %166, %166 : vector<8x128xf32>
    %169 = arith.addf %167, %168 : vector<8x128xf32>
    %cst_27 = arith.constant 5.000000e-01 : f32
    %170 = vector.broadcast %cst_27 : f32 to vector<8x128xf32>
    %171 = arith.mulf %170, %169 : vector<8x128xf32>
    %cst_28 = arith.constant 9.99999974E-6 : f32
    %172 = vector.broadcast %cst_28 : f32 to vector<8x128xf32>
    %173 = arith.addf %171, %172 : vector<8x128xf32>
    %174 = math.rsqrt %173 : vector<8x128xf32>
    %175 = arith.mulf %165, %174 : vector<8x128xf32>
    %c30 = arith.constant 30 : index
    %176 = memref.load %arg1[%c30] : memref<107xf32, #tpu.memory_space<smem>>
    %177 = vector.broadcast %176 : f32 to vector<8x128xf32>
    %178 = arith.mulf %175, %177 : vector<8x128xf32>
    %c32 = arith.constant 32 : index
    %179 = memref.load %arg1[%c32] : memref<107xf32, #tpu.memory_space<smem>>
    %180 = vector.broadcast %179 : f32 to vector<8x128xf32>
    %181 = arith.addf %178, %180 : vector<8x128xf32>
    %182 = arith.mulf %166, %174 : vector<8x128xf32>
    %c31 = arith.constant 31 : index
    %183 = memref.load %arg1[%c31] : memref<107xf32, #tpu.memory_space<smem>>
    %184 = vector.broadcast %183 : f32 to vector<8x128xf32>
    %185 = arith.mulf %182, %184 : vector<8x128xf32>
    %c33 = arith.constant 33 : index
    %186 = memref.load %arg1[%c33] : memref<107xf32, #tpu.memory_space<smem>>
    %187 = vector.broadcast %186 : f32 to vector<8x128xf32>
    %188 = arith.addf %185, %187 : vector<8x128xf32>
    %cst_29 = arith.constant 0.000000e+00 : f32
    %189 = vector.broadcast %cst_29 : f32 to vector<8x128xf32>
    %cst_30 = arith.constant 0.000000e+00 : f32
    %190 = vector.broadcast %cst_30 : f32 to vector<8x128xf32>
    %c34 = arith.constant 34 : index
    %191 = memref.load %arg1[%c34] : memref<107xf32, #tpu.memory_space<smem>>
    %192 = vector.broadcast %191 : f32 to vector<8x128xf32>
    %193 = arith.mulf %181, %192 : vector<8x128xf32>
    %c42 = arith.constant 42 : index
    %194 = memref.load %arg1[%c42] : memref<107xf32, #tpu.memory_space<smem>>
    %195 = vector.broadcast %194 : f32 to vector<8x128xf32>
    %196 = arith.mulf %188, %195 : vector<8x128xf32>
    %197 = arith.addf %193, %196 : vector<8x128xf32>
    %c50 = arith.constant 50 : index
    %198 = memref.load %arg1[%c50] : memref<107xf32, #tpu.memory_space<smem>>
    %199 = vector.broadcast %198 : f32 to vector<8x128xf32>
    %200 = arith.addf %197, %199 : vector<8x128xf32>
    %cst_31 = arith.constant 0.000000e+00 : f32
    %201 = vector.broadcast %cst_31 : f32 to vector<8x128xf32>
    %202 = arith.maximumf %200, %201 : vector<8x128xf32>
    %c58 = arith.constant 58 : index
    %203 = memref.load %arg1[%c58] : memref<107xf32, #tpu.memory_space<smem>>
    %204 = vector.broadcast %203 : f32 to vector<8x128xf32>
    %205 = arith.mulf %202, %204 : vector<8x128xf32>
    %206 = arith.addf %189, %205 : vector<8x128xf32>
    %c59 = arith.constant 59 : index
    %207 = memref.load %arg1[%c59] : memref<107xf32, #tpu.memory_space<smem>>
    %208 = vector.broadcast %207 : f32 to vector<8x128xf32>
    %209 = arith.mulf %202, %208 : vector<8x128xf32>
    %210 = arith.addf %190, %209 : vector<8x128xf32>
    %c35 = arith.constant 35 : index
    %211 = memref.load %arg1[%c35] : memref<107xf32, #tpu.memory_space<smem>>
    %212 = vector.broadcast %211 : f32 to vector<8x128xf32>
    %213 = arith.mulf %181, %212 : vector<8x128xf32>
    %c43 = arith.constant 43 : index
    %214 = memref.load %arg1[%c43] : memref<107xf32, #tpu.memory_space<smem>>
    %215 = vector.broadcast %214 : f32 to vector<8x128xf32>
    %216 = arith.mulf %188, %215 : vector<8x128xf32>
    %217 = arith.addf %213, %216 : vector<8x128xf32>
    %c51 = arith.constant 51 : index
    %218 = memref.load %arg1[%c51] : memref<107xf32, #tpu.memory_space<smem>>
    %219 = vector.broadcast %218 : f32 to vector<8x128xf32>
    %220 = arith.addf %217, %219 : vector<8x128xf32>
    %cst_32 = arith.constant 0.000000e+00 : f32
    %221 = vector.broadcast %cst_32 : f32 to vector<8x128xf32>
    %222 = arith.maximumf %220, %221 : vector<8x128xf32>
    %c60 = arith.constant 60 : index
    %223 = memref.load %arg1[%c60] : memref<107xf32, #tpu.memory_space<smem>>
    %224 = vector.broadcast %223 : f32 to vector<8x128xf32>
    %225 = arith.mulf %222, %224 : vector<8x128xf32>
    %226 = arith.addf %206, %225 : vector<8x128xf32>
    %c61 = arith.constant 61 : index
    %227 = memref.load %arg1[%c61] : memref<107xf32, #tpu.memory_space<smem>>
    %228 = vector.broadcast %227 : f32 to vector<8x128xf32>
    %229 = arith.mulf %222, %228 : vector<8x128xf32>
    %230 = arith.addf %210, %229 : vector<8x128xf32>
    %c36 = arith.constant 36 : index
    %231 = memref.load %arg1[%c36] : memref<107xf32, #tpu.memory_space<smem>>
    %232 = vector.broadcast %231 : f32 to vector<8x128xf32>
    %233 = arith.mulf %181, %232 : vector<8x128xf32>
    %c44 = arith.constant 44 : index
    %234 = memref.load %arg1[%c44] : memref<107xf32, #tpu.memory_space<smem>>
    %235 = vector.broadcast %234 : f32 to vector<8x128xf32>
    %236 = arith.mulf %188, %235 : vector<8x128xf32>
    %237 = arith.addf %233, %236 : vector<8x128xf32>
    %c52 = arith.constant 52 : index
    %238 = memref.load %arg1[%c52] : memref<107xf32, #tpu.memory_space<smem>>
    %239 = vector.broadcast %238 : f32 to vector<8x128xf32>
    %240 = arith.addf %237, %239 : vector<8x128xf32>
    %cst_33 = arith.constant 0.000000e+00 : f32
    %241 = vector.broadcast %cst_33 : f32 to vector<8x128xf32>
    %242 = arith.maximumf %240, %241 : vector<8x128xf32>
    %c62 = arith.constant 62 : index
    %243 = memref.load %arg1[%c62] : memref<107xf32, #tpu.memory_space<smem>>
    %244 = vector.broadcast %243 : f32 to vector<8x128xf32>
    %245 = arith.mulf %242, %244 : vector<8x128xf32>
    %246 = arith.addf %226, %245 : vector<8x128xf32>
    %c63 = arith.constant 63 : index
    %247 = memref.load %arg1[%c63] : memref<107xf32, #tpu.memory_space<smem>>
    %248 = vector.broadcast %247 : f32 to vector<8x128xf32>
    %249 = arith.mulf %242, %248 : vector<8x128xf32>
    %250 = arith.addf %230, %249 : vector<8x128xf32>
    %c37 = arith.constant 37 : index
    %251 = memref.load %arg1[%c37] : memref<107xf32, #tpu.memory_space<smem>>
    %252 = vector.broadcast %251 : f32 to vector<8x128xf32>
    %253 = arith.mulf %181, %252 : vector<8x128xf32>
    %c45 = arith.constant 45 : index
    %254 = memref.load %arg1[%c45] : memref<107xf32, #tpu.memory_space<smem>>
    %255 = vector.broadcast %254 : f32 to vector<8x128xf32>
    %256 = arith.mulf %188, %255 : vector<8x128xf32>
    %257 = arith.addf %253, %256 : vector<8x128xf32>
    %c53 = arith.constant 53 : index
    %258 = memref.load %arg1[%c53] : memref<107xf32, #tpu.memory_space<smem>>
    %259 = vector.broadcast %258 : f32 to vector<8x128xf32>
    %260 = arith.addf %257, %259 : vector<8x128xf32>
    %cst_34 = arith.constant 0.000000e+00 : f32
    %261 = vector.broadcast %cst_34 : f32 to vector<8x128xf32>
    %262 = arith.maximumf %260, %261 : vector<8x128xf32>
    %c64 = arith.constant 64 : index
    %263 = memref.load %arg1[%c64] : memref<107xf32, #tpu.memory_space<smem>>
    %264 = vector.broadcast %263 : f32 to vector<8x128xf32>
    %265 = arith.mulf %262, %264 : vector<8x128xf32>
    %266 = arith.addf %246, %265 : vector<8x128xf32>
    %c65 = arith.constant 65 : index
    %267 = memref.load %arg1[%c65] : memref<107xf32, #tpu.memory_space<smem>>
    %268 = vector.broadcast %267 : f32 to vector<8x128xf32>
    %269 = arith.mulf %262, %268 : vector<8x128xf32>
    %270 = arith.addf %250, %269 : vector<8x128xf32>
    %c38 = arith.constant 38 : index
    %271 = memref.load %arg1[%c38] : memref<107xf32, #tpu.memory_space<smem>>
    %272 = vector.broadcast %271 : f32 to vector<8x128xf32>
    %273 = arith.mulf %181, %272 : vector<8x128xf32>
    %c46 = arith.constant 46 : index
    %274 = memref.load %arg1[%c46] : memref<107xf32, #tpu.memory_space<smem>>
    %275 = vector.broadcast %274 : f32 to vector<8x128xf32>
    %276 = arith.mulf %188, %275 : vector<8x128xf32>
    %277 = arith.addf %273, %276 : vector<8x128xf32>
    %c54 = arith.constant 54 : index
    %278 = memref.load %arg1[%c54] : memref<107xf32, #tpu.memory_space<smem>>
    %279 = vector.broadcast %278 : f32 to vector<8x128xf32>
    %280 = arith.addf %277, %279 : vector<8x128xf32>
    %cst_35 = arith.constant 0.000000e+00 : f32
    %281 = vector.broadcast %cst_35 : f32 to vector<8x128xf32>
    %282 = arith.maximumf %280, %281 : vector<8x128xf32>
    %c66 = arith.constant 66 : index
    %283 = memref.load %arg1[%c66] : memref<107xf32, #tpu.memory_space<smem>>
    %284 = vector.broadcast %283 : f32 to vector<8x128xf32>
    %285 = arith.mulf %282, %284 : vector<8x128xf32>
    %286 = arith.addf %266, %285 : vector<8x128xf32>
    %c67 = arith.constant 67 : index
    %287 = memref.load %arg1[%c67] : memref<107xf32, #tpu.memory_space<smem>>
    %288 = vector.broadcast %287 : f32 to vector<8x128xf32>
    %289 = arith.mulf %282, %288 : vector<8x128xf32>
    %290 = arith.addf %270, %289 : vector<8x128xf32>
    %c39 = arith.constant 39 : index
    %291 = memref.load %arg1[%c39] : memref<107xf32, #tpu.memory_space<smem>>
    %292 = vector.broadcast %291 : f32 to vector<8x128xf32>
    %293 = arith.mulf %181, %292 : vector<8x128xf32>
    %c47 = arith.constant 47 : index
    %294 = memref.load %arg1[%c47] : memref<107xf32, #tpu.memory_space<smem>>
    %295 = vector.broadcast %294 : f32 to vector<8x128xf32>
    %296 = arith.mulf %188, %295 : vector<8x128xf32>
    %297 = arith.addf %293, %296 : vector<8x128xf32>
    %c55 = arith.constant 55 : index
    %298 = memref.load %arg1[%c55] : memref<107xf32, #tpu.memory_space<smem>>
    %299 = vector.broadcast %298 : f32 to vector<8x128xf32>
    %300 = arith.addf %297, %299 : vector<8x128xf32>
    %cst_36 = arith.constant 0.000000e+00 : f32
    %301 = vector.broadcast %cst_36 : f32 to vector<8x128xf32>
    %302 = arith.maximumf %300, %301 : vector<8x128xf32>
    %c68 = arith.constant 68 : index
    %303 = memref.load %arg1[%c68] : memref<107xf32, #tpu.memory_space<smem>>
    %304 = vector.broadcast %303 : f32 to vector<8x128xf32>
    %305 = arith.mulf %302, %304 : vector<8x128xf32>
    %306 = arith.addf %286, %305 : vector<8x128xf32>
    %c69 = arith.constant 69 : index
    %307 = memref.load %arg1[%c69] : memref<107xf32, #tpu.memory_space<smem>>
    %308 = vector.broadcast %307 : f32 to vector<8x128xf32>
    %309 = arith.mulf %302, %308 : vector<8x128xf32>
    %310 = arith.addf %290, %309 : vector<8x128xf32>
    %c40 = arith.constant 40 : index
    %311 = memref.load %arg1[%c40] : memref<107xf32, #tpu.memory_space<smem>>
    %312 = vector.broadcast %311 : f32 to vector<8x128xf32>
    %313 = arith.mulf %181, %312 : vector<8x128xf32>
    %c48 = arith.constant 48 : index
    %314 = memref.load %arg1[%c48] : memref<107xf32, #tpu.memory_space<smem>>
    %315 = vector.broadcast %314 : f32 to vector<8x128xf32>
    %316 = arith.mulf %188, %315 : vector<8x128xf32>
    %317 = arith.addf %313, %316 : vector<8x128xf32>
    %c56 = arith.constant 56 : index
    %318 = memref.load %arg1[%c56] : memref<107xf32, #tpu.memory_space<smem>>
    %319 = vector.broadcast %318 : f32 to vector<8x128xf32>
    %320 = arith.addf %317, %319 : vector<8x128xf32>
    %cst_37 = arith.constant 0.000000e+00 : f32
    %321 = vector.broadcast %cst_37 : f32 to vector<8x128xf32>
    %322 = arith.maximumf %320, %321 : vector<8x128xf32>
    %c70 = arith.constant 70 : index
    %323 = memref.load %arg1[%c70] : memref<107xf32, #tpu.memory_space<smem>>
    %324 = vector.broadcast %323 : f32 to vector<8x128xf32>
    %325 = arith.mulf %322, %324 : vector<8x128xf32>
    %326 = arith.addf %306, %325 : vector<8x128xf32>
    %c71 = arith.constant 71 : index
    %327 = memref.load %arg1[%c71] : memref<107xf32, #tpu.memory_space<smem>>
    %328 = vector.broadcast %327 : f32 to vector<8x128xf32>
    %329 = arith.mulf %322, %328 : vector<8x128xf32>
    %330 = arith.addf %310, %329 : vector<8x128xf32>
    %c41 = arith.constant 41 : index
    %331 = memref.load %arg1[%c41] : memref<107xf32, #tpu.memory_space<smem>>
    %332 = vector.broadcast %331 : f32 to vector<8x128xf32>
    %333 = arith.mulf %181, %332 : vector<8x128xf32>
    %c49 = arith.constant 49 : index
    %334 = memref.load %arg1[%c49] : memref<107xf32, #tpu.memory_space<smem>>
    %335 = vector.broadcast %334 : f32 to vector<8x128xf32>
    %336 = arith.mulf %188, %335 : vector<8x128xf32>
    %337 = arith.addf %333, %336 : vector<8x128xf32>
    %c57 = arith.constant 57 : index
    %338 = memref.load %arg1[%c57] : memref<107xf32, #tpu.memory_space<smem>>
    %339 = vector.broadcast %338 : f32 to vector<8x128xf32>
    %340 = arith.addf %337, %339 : vector<8x128xf32>
    %cst_38 = arith.constant 0.000000e+00 : f32
    %341 = vector.broadcast %cst_38 : f32 to vector<8x128xf32>
    %342 = arith.maximumf %340, %341 : vector<8x128xf32>
    %c72 = arith.constant 72 : index
    %343 = memref.load %arg1[%c72] : memref<107xf32, #tpu.memory_space<smem>>
    %344 = vector.broadcast %343 : f32 to vector<8x128xf32>
    %345 = arith.mulf %342, %344 : vector<8x128xf32>
    %346 = arith.addf %326, %345 : vector<8x128xf32>
    %c73 = arith.constant 73 : index
    %347 = memref.load %arg1[%c73] : memref<107xf32, #tpu.memory_space<smem>>
    %348 = vector.broadcast %347 : f32 to vector<8x128xf32>
    %349 = arith.mulf %342, %348 : vector<8x128xf32>
    %350 = arith.addf %330, %349 : vector<8x128xf32>
    %c74 = arith.constant 74 : index
    %351 = memref.load %arg1[%c74] : memref<107xf32, #tpu.memory_space<smem>>
    %352 = vector.broadcast %351 : f32 to vector<8x128xf32>
    %353 = arith.addf %346, %352 : vector<8x128xf32>
    %c75 = arith.constant 75 : index
    %354 = memref.load %arg1[%c75] : memref<107xf32, #tpu.memory_space<smem>>
    %355 = vector.broadcast %354 : f32 to vector<8x128xf32>
    %356 = arith.addf %350, %355 : vector<8x128xf32>
    %357 = arith.addf %181, %353 : vector<8x128xf32>
    %358 = arith.addf %188, %356 : vector<8x128xf32>
    %359 = arith.addf %357, %358 : vector<8x128xf32>
    %cst_39 = arith.constant 5.000000e-01 : f32
    %360 = vector.broadcast %cst_39 : f32 to vector<8x128xf32>
    %361 = arith.mulf %360, %359 : vector<8x128xf32>
    %362 = arith.subf %357, %361 : vector<8x128xf32>
    %363 = arith.subf %358, %361 : vector<8x128xf32>
    %364 = arith.mulf %362, %362 : vector<8x128xf32>
    %365 = arith.mulf %363, %363 : vector<8x128xf32>
    %366 = arith.addf %364, %365 : vector<8x128xf32>
    %cst_40 = arith.constant 5.000000e-01 : f32
    %367 = vector.broadcast %cst_40 : f32 to vector<8x128xf32>
    %368 = arith.mulf %367, %366 : vector<8x128xf32>
    %cst_41 = arith.constant 9.99999974E-6 : f32
    %369 = vector.broadcast %cst_41 : f32 to vector<8x128xf32>
    %370 = arith.addf %368, %369 : vector<8x128xf32>
    %371 = math.rsqrt %370 : vector<8x128xf32>
    %372 = arith.mulf %362, %371 : vector<8x128xf32>
    %c76 = arith.constant 76 : index
    %373 = memref.load %arg1[%c76] : memref<107xf32, #tpu.memory_space<smem>>
    %374 = vector.broadcast %373 : f32 to vector<8x128xf32>
    %375 = arith.mulf %372, %374 : vector<8x128xf32>
    %c78 = arith.constant 78 : index
    %376 = memref.load %arg1[%c78] : memref<107xf32, #tpu.memory_space<smem>>
    %377 = vector.broadcast %376 : f32 to vector<8x128xf32>
    %378 = arith.addf %375, %377 : vector<8x128xf32>
    %379 = arith.mulf %363, %371 : vector<8x128xf32>
    %c77 = arith.constant 77 : index
    %380 = memref.load %arg1[%c77] : memref<107xf32, #tpu.memory_space<smem>>
    %381 = vector.broadcast %380 : f32 to vector<8x128xf32>
    %382 = arith.mulf %379, %381 : vector<8x128xf32>
    %c79 = arith.constant 79 : index
    %383 = memref.load %arg1[%c79] : memref<107xf32, #tpu.memory_space<smem>>
    %384 = vector.broadcast %383 : f32 to vector<8x128xf32>
    %385 = arith.addf %382, %384 : vector<8x128xf32>
    %c80 = arith.constant 80 : index
    %386 = memref.load %arg1[%c80] : memref<107xf32, #tpu.memory_space<smem>>
    %387 = vector.broadcast %386 : f32 to vector<8x128xf32>
    %388 = arith.mulf %378, %387 : vector<8x128xf32>
    %c89 = arith.constant 89 : index
    %389 = memref.load %arg1[%c89] : memref<107xf32, #tpu.memory_space<smem>>
    %390 = vector.broadcast %389 : f32 to vector<8x128xf32>
    %391 = arith.mulf %385, %390 : vector<8x128xf32>
    %392 = arith.addf %388, %391 : vector<8x128xf32>
    %c98 = arith.constant 98 : index
    %393 = memref.load %arg1[%c98] : memref<107xf32, #tpu.memory_space<smem>>
    %394 = vector.broadcast %393 : f32 to vector<8x128xf32>
    %395 = arith.addf %392, %394 : vector<8x128xf32>
    %c0_42 = arith.constant 0 : index
    %c0_43 = arith.constant 0 : index
    %c0_44 = arith.constant 0 : index
    %396 = vector.load %arg4[%c0_42, %c0_43, %c0_44] : memref<9x8x128xf32, #tpu.memory_space<vmem>>, vector<1x8x128xf32>
    %397 = vector.shape_cast %396 : vector<1x8x128xf32> to vector<8x128xf32>
    %398 = vector.shape_cast %395 : vector<8x128xf32> to vector<1x8x128xf32>
    tpu.vector_store %arg4[%c0_42, %c0_43, %c0_44], %398 {strides = array<i32>} : memref<9x8x128xf32, #tpu.memory_space<vmem>>, vector<1x8x128xf32>,
    %c81 = arith.constant 81 : index
    %399 = memref.load %arg1[%c81] : memref<107xf32, #tpu.memory_space<smem>>
    %400 = vector.broadcast %399 : f32 to vector<8x128xf32>
    %401 = arith.mulf %378, %400 : vector<8x128xf32>
    %c90 = arith.constant 90 : index
    %402 = memref.load %arg1[%c90] : memref<107xf32, #tpu.memory_space<smem>>
    %403 = vector.broadcast %402 : f32 to vector<8x128xf32>
    %404 = arith.mulf %385, %403 : vector<8x128xf32>
    %405 = arith.addf %401, %404 : vector<8x128xf32>
    %c99 = arith.constant 99 : index
    %406 = memref.load %arg1[%c99] : memref<107xf32, #tpu.memory_space<smem>>
    %407 = vector.broadcast %406 : f32 to vector<8x128xf32>
    %408 = arith.addf %405, %407 : vector<8x128xf32>
    %c1_45 = arith.constant 1 : index
    %c0_46 = arith.constant 0 : index
    %c0_47 = arith.constant 0 : index
    %409 = vector.load %arg4[%c1_45, %c0_46, %c0_47] : memref<9x8x128xf32, #tpu.memory_space<vmem>>, vector<1x8x128xf32>
    %410 = vector.shape_cast %409 : vector<1x8x128xf32> to vector<8x128xf32>
    %411 = vector.shape_cast %408 : vector<8x128xf32> to vector<1x8x128xf32>
    tpu.vector_store %arg4[%c1_45, %c0_46, %c0_47], %411 {strides = array<i32>} : memref<9x8x128xf32, #tpu.memory_space<vmem>>, vector<1x8x128xf32>,
    %c82 = arith.constant 82 : index
    %412 = memref.load %arg1[%c82] : memref<107xf32, #tpu.memory_space<smem>>
    %413 = vector.broadcast %412 : f32 to vector<8x128xf32>
    %414 = arith.mulf %378, %413 : vector<8x128xf32>
    %c91 = arith.constant 91 : index
    %415 = memref.load %arg1[%c91] : memref<107xf32, #tpu.memory_space<smem>>
    %416 = vector.broadcast %415 : f32 to vector<8x128xf32>
    %417 = arith.mulf %385, %416 : vector<8x128xf32>
    %418 = arith.addf %414, %417 : vector<8x128xf32>
    %c100 = arith.constant 100 : index
    %419 = memref.load %arg1[%c100] : memref<107xf32, #tpu.memory_space<smem>>
    %420 = vector.broadcast %419 : f32 to vector<8x128xf32>
    %421 = arith.addf %418, %420 : vector<8x128xf32>
    %c2_48 = arith.constant 2 : index
    %c0_49 = arith.constant 0 : index
    %c0_50 = arith.constant 0 : index
    %422 = vector.load %arg4[%c2_48, %c0_49, %c0_50] : memref<9x8x128xf32, #tpu.memory_space<vmem>>, vector<1x8x128xf32>
    %423 = vector.shape_cast %422 : vector<1x8x128xf32> to vector<8x128xf32>
    %424 = vector.shape_cast %421 : vector<8x128xf32> to vector<1x8x128xf32>
    tpu.vector_store %arg4[%c2_48, %c0_49, %c0_50], %424 {strides = array<i32>} : memref<9x8x128xf32, #tpu.memory_space<vmem>>, vector<1x8x128xf32>,
    %c83 = arith.constant 83 : index
    %425 = memref.load %arg1[%c83] : memref<107xf32, #tpu.memory_space<smem>>
    %426 = vector.broadcast %425 : f32 to vector<8x128xf32>
    %427 = arith.mulf %378, %426 : vector<8x128xf32>
    %c92 = arith.constant 92 : index
    %428 = memref.load %arg1[%c92] : memref<107xf32, #tpu.memory_space<smem>>
    %429 = vector.broadcast %428 : f32 to vector<8x128xf32>
    %430 = arith.mulf %385, %429 : vector<8x128xf32>
    %431 = arith.addf %427, %430 : vector<8x128xf32>
    %c101 = arith.constant 101 : index
    %432 = memref.load %arg1[%c101] : memref<107xf32, #tpu.memory_space<smem>>
    %433 = vector.broadcast %432 : f32 to vector<8x128xf32>
    %434 = arith.addf %431, %433 : vector<8x128xf32>
    %c3_51 = arith.constant 3 : index
    %c0_52 = arith.constant 0 : index
    %c0_53 = arith.constant 0 : index
    %435 = vector.load %arg4[%c3_51, %c0_52, %c0_53] : memref<9x8x128xf32, #tpu.memory_space<vmem>>, vector<1x8x128xf32>
    %436 = vector.shape_cast %435 : vector<1x8x128xf32> to vector<8x128xf32>
    %437 = vector.shape_cast %434 : vector<8x128xf32> to vector<1x8x128xf32>
    tpu.vector_store %arg4[%c3_51, %c0_52, %c0_53], %437 {strides = array<i32>} : memref<9x8x128xf32, #tpu.memory_space<vmem>>, vector<1x8x128xf32>,
    %c84 = arith.constant 84 : index
    %438 = memref.load %arg1[%c84] : memref<107xf32, #tpu.memory_space<smem>>
    %439 = vector.broadcast %438 : f32 to vector<8x128xf32>
    %440 = arith.mulf %378, %439 : vector<8x128xf32>
    %c93 = arith.constant 93 : index
    %441 = memref.load %arg1[%c93] : memref<107xf32, #tpu.memory_space<smem>>
    %442 = vector.broadcast %441 : f32 to vector<8x128xf32>
    %443 = arith.mulf %385, %442 : vector<8x128xf32>
    %444 = arith.addf %440, %443 : vector<8x128xf32>
    %c102 = arith.constant 102 : index
    %445 = memref.load %arg1[%c102] : memref<107xf32, #tpu.memory_space<smem>>
    %446 = vector.broadcast %445 : f32 to vector<8x128xf32>
    %447 = arith.addf %444, %446 : vector<8x128xf32>
    %c4_54 = arith.constant 4 : index
    %c0_55 = arith.constant 0 : index
    %c0_56 = arith.constant 0 : index
    %448 = vector.load %arg4[%c4_54, %c0_55, %c0_56] : memref<9x8x128xf32, #tpu.memory_space<vmem>>, vector<1x8x128xf32>
    %449 = vector.shape_cast %448 : vector<1x8x128xf32> to vector<8x128xf32>
    %450 = vector.shape_cast %447 : vector<8x128xf32> to vector<1x8x128xf32>
    tpu.vector_store %arg4[%c4_54, %c0_55, %c0_56], %450 {strides = array<i32>} : memref<9x8x128xf32, #tpu.memory_space<vmem>>, vector<1x8x128xf32>,
    %c85 = arith.constant 85 : index
    %451 = memref.load %arg1[%c85] : memref<107xf32, #tpu.memory_space<smem>>
    %452 = vector.broadcast %451 : f32 to vector<8x128xf32>
    %453 = arith.mulf %378, %452 : vector<8x128xf32>
    %c94 = arith.constant 94 : index
    %454 = memref.load %arg1[%c94] : memref<107xf32, #tpu.memory_space<smem>>
    %455 = vector.broadcast %454 : f32 to vector<8x128xf32>
    %456 = arith.mulf %385, %455 : vector<8x128xf32>
    %457 = arith.addf %453, %456 : vector<8x128xf32>
    %c103 = arith.constant 103 : index
    %458 = memref.load %arg1[%c103] : memref<107xf32, #tpu.memory_space<smem>>
    %459 = vector.broadcast %458 : f32 to vector<8x128xf32>
    %460 = arith.addf %457, %459 : vector<8x128xf32>
    %c5_57 = arith.constant 5 : index
    %c0_58 = arith.constant 0 : index
    %c0_59 = arith.constant 0 : index
    %461 = vector.load %arg4[%c5_57, %c0_58, %c0_59] : memref<9x8x128xf32, #tpu.memory_space<vmem>>, vector<1x8x128xf32>
    %462 = vector.shape_cast %461 : vector<1x8x128xf32> to vector<8x128xf32>
    %463 = vector.shape_cast %460 : vector<8x128xf32> to vector<1x8x128xf32>
    tpu.vector_store %arg4[%c5_57, %c0_58, %c0_59], %463 {strides = array<i32>} : memref<9x8x128xf32, #tpu.memory_space<vmem>>, vector<1x8x128xf32>,
    %c86 = arith.constant 86 : index
    %464 = memref.load %arg1[%c86] : memref<107xf32, #tpu.memory_space<smem>>
    %465 = vector.broadcast %464 : f32 to vector<8x128xf32>
    %466 = arith.mulf %378, %465 : vector<8x128xf32>
    %c95 = arith.constant 95 : index
    %467 = memref.load %arg1[%c95] : memref<107xf32, #tpu.memory_space<smem>>
    %468 = vector.broadcast %467 : f32 to vector<8x128xf32>
    %469 = arith.mulf %385, %468 : vector<8x128xf32>
    %470 = arith.addf %466, %469 : vector<8x128xf32>
    %c104 = arith.constant 104 : index
    %471 = memref.load %arg1[%c104] : memref<107xf32, #tpu.memory_space<smem>>
    %472 = vector.broadcast %471 : f32 to vector<8x128xf32>
    %473 = arith.addf %470, %472 : vector<8x128xf32>
    %c6_60 = arith.constant 6 : index
    %c0_61 = arith.constant 0 : index
    %c0_62 = arith.constant 0 : index
    %474 = vector.load %arg4[%c6_60, %c0_61, %c0_62] : memref<9x8x128xf32, #tpu.memory_space<vmem>>, vector<1x8x128xf32>
    %475 = vector.shape_cast %474 : vector<1x8x128xf32> to vector<8x128xf32>
    %476 = vector.shape_cast %473 : vector<8x128xf32> to vector<1x8x128xf32>
    tpu.vector_store %arg4[%c6_60, %c0_61, %c0_62], %476 {strides = array<i32>} : memref<9x8x128xf32, #tpu.memory_space<vmem>>, vector<1x8x128xf32>,
    %c87 = arith.constant 87 : index
    %477 = memref.load %arg1[%c87] : memref<107xf32, #tpu.memory_space<smem>>
    %478 = vector.broadcast %477 : f32 to vector<8x128xf32>
    %479 = arith.mulf %378, %478 : vector<8x128xf32>
    %c96 = arith.constant 96 : index
    %480 = memref.load %arg1[%c96] : memref<107xf32, #tpu.memory_space<smem>>
    %481 = vector.broadcast %480 : f32 to vector<8x128xf32>
    %482 = arith.mulf %385, %481 : vector<8x128xf32>
    %483 = arith.addf %479, %482 : vector<8x128xf32>
    %c105 = arith.constant 105 : index
    %484 = memref.load %arg1[%c105] : memref<107xf32, #tpu.memory_space<smem>>
    %485 = vector.broadcast %484 : f32 to vector<8x128xf32>
    %486 = arith.addf %483, %485 : vector<8x128xf32>
    %c7_63 = arith.constant 7 : index
    %c0_64 = arith.constant 0 : index
    %c0_65 = arith.constant 0 : index
    %487 = vector.load %arg4[%c7_63, %c0_64, %c0_65] : memref<9x8x128xf32, #tpu.memory_space<vmem>>, vector<1x8x128xf32>
    %488 = vector.shape_cast %487 : vector<1x8x128xf32> to vector<8x128xf32>
    %489 = vector.shape_cast %486 : vector<8x128xf32> to vector<1x8x128xf32>
    tpu.vector_store %arg4[%c7_63, %c0_64, %c0_65], %489 {strides = array<i32>} : memref<9x8x128xf32, #tpu.memory_space<vmem>>, vector<1x8x128xf32>,
    %c88 = arith.constant 88 : index
    %490 = memref.load %arg1[%c88] : memref<107xf32, #tpu.memory_space<smem>>
    %491 = vector.broadcast %490 : f32 to vector<8x128xf32>
    %492 = arith.mulf %378, %491 : vector<8x128xf32>
    %c97 = arith.constant 97 : index
    %493 = memref.load %arg1[%c97] : memref<107xf32, #tpu.memory_space<smem>>
    %494 = vector.broadcast %493 : f32 to vector<8x128xf32>
    %495 = arith.mulf %385, %494 : vector<8x128xf32>
    %496 = arith.addf %492, %495 : vector<8x128xf32>
    %c106 = arith.constant 106 : index
    %497 = memref.load %arg1[%c106] : memref<107xf32, #tpu.memory_space<smem>>
    %498 = vector.broadcast %497 : f32 to vector<8x128xf32>
    %499 = arith.addf %496, %498 : vector<8x128xf32>
    %c8_66 = arith.constant 8 : index
    %c0_67 = arith.constant 0 : index
    %c0_68 = arith.constant 0 : index
    %500 = vector.load %arg4[%c8_66, %c0_67, %c0_68] : memref<9x8x128xf32, #tpu.memory_space<vmem>>, vector<1x8x128xf32>
    %501 = vector.shape_cast %500 : vector<1x8x128xf32> to vector<8x128xf32>
    %502 = vector.shape_cast %499 : vector<8x128xf32> to vector<1x8x128xf32>
    tpu.vector_store %arg4[%c8_66, %c0_67, %c0_68], %502 {strides = array<i32>} : memref<9x8x128xf32, #tpu.memory_space<vmem>>, vector<1x8x128xf32>,
    return
  }
  func.func @transform_0(%arg0: i32, %arg1: memref<107xf32, #tpu.memory_space<smem>>) -> (i32, i32, i32) {
    %c0_i32 = arith.constant 0 : i32
    %c0_i32_0 = arith.constant 0 : i32
    %c0_i32_1 = arith.constant 0 : i32
    return %c0_i32, %c0_i32_0, %arg0 : i32, i32, i32
  }
  func.func @transform_1(%arg0: i32, %arg1: memref<107xf32, #tpu.memory_space<smem>>) -> (i32, i32, i32) {
    %c0_i32 = arith.constant 0 : i32
    %c0_i32_0 = arith.constant 0 : i32
    %c0_i32_1 = arith.constant 0 : i32
    %c0_i32_2 = arith.constant 0 : i32
    return %c0_i32, %c0_i32_0, %c0_i32_1 : i32, i32, i32
  }
  func.func @transform_2(%arg0: i32, %arg1: memref<107xf32, #tpu.memory_space<smem>>) -> (i32, i32, i32) {
    %c0_i32 = arith.constant 0 : i32
    %c0_i32_0 = arith.constant 0 : i32
    %c0_i32_1 = arith.constant 0 : i32
    return %c0_i32, %c0_i32_0, %arg0 : i32, i32, i32
  }
}

</mosaic_0001>

<llo_original>
// kernel: tpu_custom_call.1
$region0: #{tpu_custom_call.1}
  #allocation0 [shape = 'u32[]', space=smem, size = 0x4, offset = 0x4, fixed_abs, tag = 'smem constant byte address 0x4 - core index']
  #allocation1 [shape = 'u32[144,128]{1,0:T(1,128)}', space=vmem, size = 0x12000, scoped, tag = 'internal scratch']
  #allocation2 [shape = 's32[1]{0}', space=sflag, size = 0x4, scoped, tag = 'scoped memory for tpu_custom_call.1']
  #allocation3 [shape = 'u8[512]{0}', space=smem, size = 0x200, scoped, tag = 'prefetched SMEM operand 0']
  %s0 = inlined_call_operand.hbm [shape: f32[107], index: 0, kind: input, shape index: {}]
  %s1 = inlined_call_operand.hbm [shape: f32[2,8,128], index: 1, kind: input, shape index: {}]
  %s2 = inlined_call_operand.hbm [shape: f32[5,8,128], index: 2, kind: input, shape index: {}]
  %s3 = inlined_call_operand.hbm [shape: f32[9,8,128], index: 3, kind: output, shape index: {}]
  %s4 = sld [smem:[#allocation0]]
  $region26: #{tpu_custom_call.1} parent=0
    _
  %s6 = ssub.s32 1, %s4
  %s7 = scalar_select 0, %s6, %s4
  %9 = dma.hbm_to_smem %s0, 16, [#allocation3], [#allocation2]
  %10 = dma.done [#allocation2], 16
  %11 = sfence
  $region1: #{tpu_custom_call.1} parent=0
    #allocation4 [shape = 'u8[8192]{0}', space=vmem, size = 0x2000, scoped, tag = 'input window, operand 1, single buffered']
    #allocation5 [shape = 's32[1]{0}', space=sflag, size = 0x4, scoped, tag = 'scoped memory for tpu_custom_call.1']
    #allocation6 [shape = 's32[1]{0}', space=sflag, size = 0x4, scoped, tag = 'scoped memory for tpu_custom_call.1']
    #allocation7 [shape = 'u8[20480]{0}', space=vmem, size = 0x5000, scoped, tag = 'input window, operand 2, single buffered']
    #allocation8 [shape = 's32[1]{0}', space=sflag, size = 0x4, scoped, tag = 'scoped memory for tpu_custom_call.1']
    #allocation9 [shape = 'u8[36864]{0}', space=vmem, size = 0x9000, scoped, tag = 'output window, operand 0, single buffered']
    %12 = vsyncpa [#allocation5], 0
    %13 = vsyncpa [#allocation8], 0
    %14 = vsyncpa [#allocation6], 0
    // Predicated region
    $region2: #{tpu_custom_call.1} parent=1 // pred_check
      _
    $region3: #{tpu_custom_call.1} parent=1 // pred_check_branch
      %16 = sbr.rel (0) target = $region5
    $region4: #{tpu_custom_call.1} parent=1 // pred_region
      %s18 = ssub.s32 256, 256
      %19 = vsyncadd [#allocation5], %s18
      %s20 = sshll.u32 [#allocation4], 4
      %s21 = int_to_ptr.vmem [resolvable:$true] %s20
      %26 = dma.hbm_to_vmem [thread:$0]  %s1, 256, %s21, [#allocation5], 128, 128, 8
    $region5: #{tpu_custom_call.1} parent=1 // pred_fallthru
      _
    // Predicated region
    $region6: #{tpu_custom_call.1} parent=1 // pred_check
      _
    $region7: #{tpu_custom_call.1} parent=1 // pred_check_branch
      %28 = sbr.rel (0) target = $region9
    $region8: #{tpu_custom_call.1} parent=1 // pred_region
      %s30 = ssub.s32 640, 640
      %31 = vsyncadd [#allocation8], %s30
      %s32 = sshll.u32 [#allocation7], 4
      %s33 = int_to_ptr.vmem [resolvable:$true] %s32
      %38 = dma.hbm_to_vmem [thread:$0]  %s2, 640, %s33, [#allocation8], 128, 128, 8
    $region9: #{tpu_custom_call.1} parent=1 // pred_fallthru
      _
    // Predicated region
    $region10: #{tpu_custom_call.1} parent=1 // pred_check
      _
    $region11: #{tpu_custom_call.1} parent=1 // pred_check_branch
      %40 = sbr.rel (0) target = $region13
    $region12: #{tpu_custom_call.1} parent=1 // pred_region
      %41 = dma.done [#allocation5], 256
    $region13: #{tpu_custom_call.1} parent=1 // pred_fallthru
      _
    // Predicated region
    $region14: #{tpu_custom_call.1} parent=1 // pred_check
      _
    $region15: #{tpu_custom_call.1} parent=1 // pred_check_branch
      %43 = sbr.rel (0) target = $region17
    $region16: #{tpu_custom_call.1} parent=1 // pred_region
      %44 = dma.done [#allocation8], 640
    $region17: #{tpu_custom_call.1} parent=1 // pred_fallthru
      _
    %v45 = vld [vmem:[#allocation4] sm:$0xff]
    %s46 = scalar_lea.vmem [#allocation4], 8
    %v47 = vld [vmem:[%s46] sm:$0xff]
    %s48 = sld [smem:[#allocation3]]
    %v49 = vstv %s48
    %v50 = vmul.f32 %v45, %v49
    %s51 = sld [smem:[#allocation3 + $0x2]]
    %v52 = vstv %s51
    %v53 = vmul.f32 %v47, %v52
    %v54 = vadd.f32 %v50, %v53
    %s55 = sld [smem:[#allocation3 + $0x4]]
    %v56 = vstv %s55
    %v57 = vadd.f32 %v54, %v56
    %s58 = sld [smem:[#allocation3 + $0x1]]
    %v59 = vstv %s58
    %v60 = vmul.f32 %v45, %v59
    %s61 = sld [smem:[#allocation3 + $0x3]]
    %v62 = vstv %s61
    %v63 = vmul.f32 %v47, %v62
    %v64 = vadd.f32 %v60, %v63
    %s65 = sld [smem:[#allocation3 + $0x5]]
    %v66 = vstv %s65
    %v67 = vadd.f32 %v64, %v66
    %v68 = vld [vmem:[#allocation7] sm:$0xff]
    %s69 = scalar_lea.vmem [#allocation7], 8
    %v70 = vld [vmem:[%s69] sm:$0xff]
    %s71 = scalar_lea.vmem [#allocation7], 16
    %v72 = vld [vmem:[%s71] sm:$0xff]
    %s73 = scalar_lea.vmem [#allocation7], 24
    %v74 = vld [vmem:[%s73] sm:$0xff]
    %s75 = scalar_lea.vmem [#allocation7], 32
    %v76 = vld [vmem:[%s75] sm:$0xff]
    %v77 = vmul.f32 %v57, %v68
    %v78 = vmul.f32 %v67, %v72
    %v79 = vsub.f32 %v77, %v78
    %v80 = vmul.f32 %v67, %v70
    %v81 = vmul.f32 %v57, %v74
    %v82 = vadd.f32 %v80, %v81
    %s83 = sld [smem:[#allocation3 + $0x6]]
    %v84 = vstv %s83
    %v85 = vmul.f32 %v79, %v84
    %s86 = sld [smem:[#allocation3 + $0x8]]
    %v87 = vstv %s86
    %v88 = vmul.f32 %v82, %v87
    %v89 = vadd.f32 %v85, %v88
    %s90 = sld [smem:[#allocation3 + $0xa]]
    %v91 = vstv %s90
    %v92 = vadd.f32 %v89, %v91
    %s93 = sld [smem:[#allocation3 + $0x7]]
    %v94 = vstv %s93
    %v95 = vmul.f32 %v79, %v94
    %s96 = sld [smem:[#allocation3 + $0x9]]
    %v97 = vstv %s96
    %v98 = vmul.f32 %v82, %v97
    %v99 = vadd.f32 %v95, %v98
    %s100 = sld [smem:[#allocation3 + $0xb]]
    %v101 = vstv %s100
    %v102 = vadd.f32 %v99, %v101
    %s103 = sld [smem:[#allocation3 + $0xc]]
    %v104 = vstv %s103
    %v105 = vmul.f32 %v79, %v104
    %s106 = sld [smem:[#allocation3 + $0xe]]
    %v107 = vstv %s106
    %v108 = vmul.f32 %v82, %v107
    %v109 = vadd.f32 %v105, %v108
    %s110 = sld [smem:[#allocation3 + $0x10]]
    %v111 = vstv %s110
    %v112 = vadd.f32 %v109, %v111
    %s113 = sld [smem:[#allocation3 + $0xd]]
    %v114 = vstv %s113
    %v115 = vmul.f32 %v79, %v114
    %s116 = sld [smem:[#allocation3 + $0xf]]
    %v117 = vstv %s116
    %v118 = vmul.f32 %v82, %v117
    %v119 = vadd.f32 %v115, %v118
    %s120 = sld [smem:[#allocation3 + $0x11]]
    %v121 = vstv %s120
    %v122 = vadd.f32 %v119, %v121
    %s123 = sld [smem:[#allocation3 + $0x12]]
    %v124 = vstv %s123
    %v125 = vmul.f32 %v57, %v124
    %s126 = sld [smem:[#allocation3 + $0x14]]
    %v127 = vstv %s126
    %v128 = vmul.f32 %v67, %v127
    %v129 = vadd.f32 %v125, %v128
    %s130 = sld [smem:[#allocation3 + $0x16]]
    %v131 = vstv %s130
    %v132 = vadd.f32 %v129, %v131
    %s133 = sld [smem:[#allocation3 + $0x13]]
    %v134 = vstv %s133
    %v135 = vmul.f32 %v57, %v134
    %s136 = sld [smem:[#allocation3 + $0x15]]
    %v137 = vstv %s136
    %v138 = vmul.f32 %v67, %v137
    %v139 = vadd.f32 %v135, %v138
    %s140 = sld [smem:[#allocation3 + $0x17]]
    %v141 = vstv %s140
    %v142 = vadd.f32 %v139, %v141
    %v144 = vcombine.high %v92, %v92
    %v146 = vunpack.c.l.s4 1966171168
    %v147 = vunpack.c.0.s8 %v146
    %v148 = vlaneseq
    %v149 = vshrl.u32 %v148, 7
    %v150 = vsub.s32 %v147, %v149
    %v151 = vrot.slane %v92, %v150
    %v153 = vunpack.c.l.s4 1966171168
    %v154 = vunpack.c.0.s8 %v153
    %v155 = vlaneseq
    %v156 = vshrl.u32 %v155, 7
    %v157 = vsub.s32 %v154, %v156
    %v158 = vrot.slane %v144, %v157
    %v159 = vcombine.high %v151, %v151
    %v160 = vcombine.high %v158, %v158
    %v162 = vunpack.c.l.s4 1966171168
    %v163 = vunpack.c.0.s8 %v162
    %v164 = vlaneseq
    %v165 = vshrl.u32 %v164, 7
    %v166 = vsub.s32 %v163, %v165
    %v167 = vrot.slane %v151, %v166
    %v169 = vunpack.c.l.s4 1966171168
    %v170 = vunpack.c.0.s8 %v169
    %v171 = vlaneseq
    %v172 = vshrl.u32 %v171, 7
    %v173 = vsub.s32 %v170, %v172
    %v174 = vrot.slane %v158, %v173
    %v176 = vunpack.c.l.s4 1966171168
    %v177 = vunpack.c.0.s8 %v176
    %v178 = vlaneseq
    %v179 = vshrl.u32 %v178, 7
    %v180 = vsub.s32 %v177, %v179
    %v181 = vrot.slane %v159, %v180
    %v183 = vunpack.c.l.s4 1966171168
    %v184 = vunpack.c.0.s8 %v183
    %v185 = vlaneseq
    %v186 = vshrl.u32 %v185, 7
    %v187 = vsub.s32 %v184, %v186
    %v188 = vrot.slane %v160, %v187
    %v189 = vcombine.high %v167, %v167
    %v190 = vcombine.high %v174, %v174
    %v191 = vcombine.high %v181, %v181
    %v192 = vcombine.high %v188, %v188
    %v193 = vlaneseq
    %v194 = vshrl.u32 %v193, 7
    %v195 = vsub.s32 0, %v194
    %v196 = vrot.slane %v167, %v195
    %v197 = vlaneseq
    %v198 = vshrl.u32 %v197, 7
    %v199 = vsub.s32 0, %v198
    %v200 = vrot.slane %v181, %v199
    %v201 = vlaneseq
    %v202 = vshrl.u32 %v201, 7
    %v203 = vsub.s32 0, %v202
    %v204 = vrot.slane %v189, %v203
    %v205 = vlaneseq
    %v206 = vshrl.u32 %v205, 7
    %v207 = vsub.s32 0, %v206
    %v208 = vrot.slane %v191, %v207
    %v209 = vlaneseq
    %v210 = vshrl.u32 %v209, 7
    %v211 = vsub.s32 0, %v210
    %v212 = vrot.slane %v174, %v211
    %v213 = vlaneseq
    %v214 = vshrl.u32 %v213, 7
    %v215 = vsub.s32 0, %v214
    %v216 = vrot.slane %v188, %v215
    %v217 = vlaneseq
    %v218 = vshrl.u32 %v217, 7
    %v219 = vsub.s32 0, %v218
    %v220 = vrot.slane %v190, %v219
    %v221 = vlaneseq
    %v222 = vshrl.u32 %v221, 7
    %v223 = vsub.s32 0, %v222
    %v224 = vrot.slane %v192, %v223
    %v233 = vmul.f32 %v196, %v112
    %v234 = vmul.f32 %v200, %v112
    %v235 = vmul.f32 %v204, %v112
    %v236 = vmul.f32 %v208, %v112
    %v237 = vmul.f32 %v212, %v112
    %v238 = vmul.f32 %v216, %v112
    %v239 = vmul.f32 %v220, %v112
    %v240 = vmul.f32 %v224, %v112
    %v242 = vcombine.high %v102, %v102
    %v244 = vunpack.c.l.s4 1966171168
    %v245 = vunpack.c.0.s8 %v244
    %v246 = vlaneseq
    %v247 = vshrl.u32 %v246, 7
    %v248 = vsub.s32 %v245, %v247
    %v249 = vrot.slane %v102, %v248
    %v251 = vunpack.c.l.s4 1966171168
    %v252 = vunpack.c.0.s8 %v251
    %v253 = vlaneseq
    %v254 = vshrl.u32 %v253, 7
    %v255 = vsub.s32 %v252, %v254
    %v256 = vrot.slane %v242, %v255
    %v257 = vcombine.high %v249, %v249
    %v258 = vcombine.high %v256, %v256
    %v260 = vunpack.c.l.s4 1966171168
    %v261 = vunpack.c.0.s8 %v260
    %v262 = vlaneseq
    %v263 = vshrl.u32 %v262, 7
    %v264 = vsub.s32 %v261, %v263
    %v265 = vrot.slane %v249, %v264
    %v267 = vunpack.c.l.s4 1966171168
    %v268 = vunpack.c.0.s8 %v267
    %v269 = vlaneseq
    %v270 = vshrl.u32 %v269, 7
    %v271 = vsub.s32 %v268, %v270
    %v272 = vrot.slane %v256, %v271
    %v274 = vunpack.c.l.s4 1966171168
    %v275 = vunpack.c.0.s8 %v274
    %v276 = vlaneseq
    %v277 = vshrl.u32 %v276, 7
    %v278 = vsub.s32 %v275, %v277
    %v279 = vrot.slane %v257, %v278
    %v281 = vunpack.c.l.s4 1966171168
    %v282 = vunpack.c.0.s8 %v281
    %v283 = vlaneseq
    %v284 = vshrl.u32 %v283, 7
    %v285 = vsub.s32 %v282, %v284
    %v286 = vrot.slane %v258, %v285
    %v287 = vcombine.high %v265, %v265
    %v288 = vcombine.high %v272, %v272
    %v289 = vcombine.high %v279, %v279
    %v290 = vcombine.high %v286, %v286
    %v291 = vlaneseq
    %v292 = vshrl.u32 %v291, 7
    %v293 = vsub.s32 0, %v292
    %v294 = vrot.slane %v265, %v293
    %v295 = vlaneseq
    %v296 = vshrl.u32 %v295, 7
    %v297 = vsub.s32 0, %v296
    %v298 = vrot.slane %v279, %v297
    %v299 = vlaneseq
    %v300 = vshrl.u32 %v299, 7
    %v301 = vsub.s32 0, %v300
    %v302 = vrot.slane %v287, %v301
    %v303 = vlaneseq
    %v304 = vshrl.u32 %v303, 7
    %v305 = vsub.s32 0, %v304
    %v306 = vrot.slane %v289, %v305
    %v307 = vlaneseq
    %v308 = vshrl.u32 %v307, 7
    %v309 = vsub.s32 0, %v308
    %v310 = vrot.slane %v272, %v309
    %v311 = vlaneseq
    %v312 = vshrl.u32 %v311, 7
    %v313 = vsub.s32 0, %v312
    %v314 = vrot.slane %v286, %v313
    %v315 = vlaneseq
    %v316 = vshrl.u32 %v315, 7
    %v317 = vsub.s32 0, %v316
    %v318 = vrot.slane %v288, %v317
    %v319 = vlaneseq
    %v320 = vshrl.u32 %v319, 7
    %v321 = vsub.s32 0, %v320
    %v322 = vrot.slane %v290, %v321
    %v331 = vmul.f32 %v294, %v122
    %v332 = vmul.f32 %v298, %v122
    %v333 = vmul.f32 %v302, %v122
    %v334 = vmul.f32 %v306, %v122
    %v335 = vmul.f32 %v310, %v122
    %v336 = vmul.f32 %v314, %v122
    %v337 = vmul.f32 %v318, %v122
    %v338 = vmul.f32 %v322, %v122
    %v339 = vadd.f32 %v233, %v331
    %v340 = vadd.f32 %v234, %v332
    %v341 = vadd.f32 %v235, %v333
    %v342 = vadd.f32 %v236, %v334
    %v343 = vadd.f32 %v237, %v335
    %v344 = vadd.f32 %v238, %v336
    %v345 = vadd.f32 %v239, %v337
    %v346 = vadd.f32 %v240, %v338
    %v348 = vcombine.high %v76, %v76
    %v350 = vunpack.c.l.s4 1966171168
    %v351 = vunpack.c.0.s8 %v350
    %v352 = vlaneseq
    %v353 = vshrl.u32 %v352, 7
    %v354 = vsub.s32 %v351, %v353
    %v355 = vrot.slane %v76, %v354
    %v357 = vunpack.c.l.s4 1966171168
    %v358 = vunpack.c.0.s8 %v357
    %v359 = vlaneseq
    %v360 = vshrl.u32 %v359, 7
    %v361 = vsub.s32 %v358, %v360
    %v362 = vrot.slane %v348, %v361
    %v363 = vcombine.high %v355, %v355
    %v364 = vcombine.high %v362, %v362
    %v366 = vunpack.c.l.s4 1966171168
    %v367 = vunpack.c.0.s8 %v366
    %v368 = vlaneseq
    %v369 = vshrl.u32 %v368, 7
    %v370 = vsub.s32 %v367, %v369
    %v371 = vrot.slane %v355, %v370
    %v373 = vunpack.c.l.s4 1966171168
    %v374 = vunpack.c.0.s8 %v373
    %v375 = vlaneseq
    %v376 = vshrl.u32 %v375, 7
    %v377 = vsub.s32 %v374, %v376
    %v378 = vrot.slane %v362, %v377
    %v380 = vunpack.c.l.s4 1966171168
    %v381 = vunpack.c.0.s8 %v380
    %v382 = vlaneseq
    %v383 = vshrl.u32 %v382, 7
    %v384 = vsub.s32 %v381, %v383
    %v385 = vrot.slane %v363, %v384
    %v387 = vunpack.c.l.s4 1966171168
    %v388 = vunpack.c.0.s8 %v387
    %v389 = vlaneseq
    %v390 = vshrl.u32 %v389, 7
    %v391 = vsub.s32 %v388, %v390
    %v392 = vrot.slane %v364, %v391
    %v393 = vcombine.high %v371, %v371
    %v394 = vcombine.high %v378, %v378
    %v395 = vcombine.high %v385, %v385
    %v396 = vcombine.high %v392, %v392
    %v397 = vlaneseq
    %v398 = vshrl.u32 %v397, 7
    %v399 = vsub.s32 0, %v398
    %v400 = vrot.slane %v371, %v399
    %v401 = vlaneseq
    %v402 = vshrl.u32 %v401, 7
    %v403 = vsub.s32 0, %v402
    %v404 = vrot.slane %v385, %v403
    %v405 = vlaneseq
    %v406 = vshrl.u32 %v405, 7
    %v407 = vsub.s32 0, %v406
    %v408 = vrot.slane %v393, %v407
    %v409 = vlaneseq
    %v410 = vshrl.u32 %v409, 7
    %v411 = vsub.s32 0, %v410
    %v412 = vrot.slane %v395, %v411
    %v413 = vlaneseq
    %v414 = vshrl.u32 %v413, 7
    %v415 = vsub.s32 0, %v414
    %v416 = vrot.slane %v378, %v415
    %v417 = vlaneseq
    %v418 = vshrl.u32 %v417, 7
    %v419 = vsub.s32 0, %v418
    %v420 = vrot.slane %v392, %v419
    %v421 = vlaneseq
    %v422 = vshrl.u32 %v421, 7
    %v423 = vsub.s32 0, %v422
    %v424 = vrot.slane %v394, %v423
    %v425 = vlaneseq
    %v426 = vshrl.u32 %v425, 7
    %v427 = vsub.s32 0, %v426
    %v428 = vrot.slane %v396, %v427
    %vm437 = vcmp.le.f32.partialorder %v76, %v400
    %vm438 = vcmp.le.f32.partialorder %v76, %v404
    %vm439 = vcmp.le.f32.partialorder %v76, %v408
    %vm440 = vcmp.le.f32.partialorder %v76, %v412
    %vm441 = vcmp.le.f32.partialorder %v76, %v416
    %vm442 = vcmp.le.f32.partialorder %v76, %v420
    %vm443 = vcmp.le.f32.partialorder %v76, %v424
    %vm444 = vcmp.le.f32.partialorder %v76, %v428
    %v445 = vsel %vm437, %v339, -inf
    %v446 = vsel %vm438, %v340, -inf
    %v447 = vsel %vm439, %v341, -inf
    %v448 = vsel %vm440, %v342, -inf
    %v449 = vsel %vm441, %v343, -inf
    %v450 = vsel %vm442, %v344, -inf
    %v451 = vsel %vm443, %v345, -inf
    %v452 = vsel %vm444, %v346, -inf
    %v453 = vrot.slane %v445, 4
    %v454 = vmax.f32 %v445, %v453
    %v455 = vrot.slane %v454, 2
    %v456 = vmax.f32 %v454, %v455
    %v457 = vrot.slane %v456, 1
    %v458 = vmax.f32 %v456, %v457
    %v459 = vrot.slane %v446, 4
    %v460 = vmax.f32 %v446, %v459
    %v461 = vrot.slane %v460, 2
    %v462 = vmax.f32 %v460, %v461
    %v463 = vrot.slane %v462, 1
    %v464 = vmax.f32 %v462, %v463
    %v465 = vrot.slane %v447, 4
    %v466 = vmax.f32 %v447, %v465
    %v467 = vrot.slane %v466, 2
    %v468 = vmax.f32 %v466, %v467
    %v469 = vrot.slane %v468, 1
    %v470 = vmax.f32 %v468, %v469
    %v471 = vrot.slane %v448, 4
    %v472 = vmax.f32 %v448, %v471
    %v473 = vrot.slane %v472, 2
    %v474 = vmax.f32 %v472, %v473
    %v475 = vrot.slane %v474, 1
    %v476 = vmax.f32 %v474, %v475
    %v477 = vrot.slane %v449, 4
    %v478 = vmax.f32 %v449, %v477
    %v479 = vrot.slane %v478, 2
    %v480 = vmax.f32 %v478, %v479
    %v481 = vrot.slane %v480, 1
    %v482 = vmax.f32 %v480, %v481
    %v483 = vrot.slane %v450, 4
    %v484 = vmax.f32 %v450, %v483
    %v485 = vrot.slane %v484, 2
    %v486 = vmax.f32 %v484, %v485
    %v487 = vrot.slane %v486, 1
    %v488 = vmax.f32 %v486, %v487
    %v489 = vrot.slane %v451, 4
    %v490 = vmax.f32 %v451, %v489
    %v491 = vrot.slane %v490, 2
    %v492 = vmax.f32 %v490, %v491
    %v493 = vrot.slane %v492, 1
    %v494 = vmax.f32 %v492, %v493
    %v495 = vrot.slane %v452, 4
    %v496 = vmax.f32 %v452, %v495
    %v497 = vrot.slane %v496, 2
    %v498 = vmax.f32 %v496, %v497
    %v499 = vrot.slane %v498, 1
    %v500 = vmax.f32 %v498, %v499
    %v501 = vsub.f32 %v445, %v458
    %v502 = vsub.f32 %v446, %v464
    %v503 = vsub.f32 %v447, %v470
    %v504 = vsub.f32 %v448, %v476
    %v505 = vsub.f32 %v449, %v482
    %v506 = vsub.f32 %v450, %v488
    %v507 = vsub.f32 %v451, %v494
    %v508 = vsub.f32 %v452, %v500
    %v509 = vmul.f32 %v501, 1.442695
    %v510 = vpow.pop %v509
    %v511 = vmul.f32 %v502, 1.442695
    %v512 = vpow.pop %v511
    %v513 = vmul.f32 %v503, 1.442695
    %v514 = vpow.pop %v513
    %v515 = vmul.f32 %v504, 1.442695
    %v516 = vpow.pop %v515
    %v517 = vmul.f32 %v505, 1.442695
    %v518 = vpow.pop %v517
    %v519 = vmul.f32 %v506, 1.442695
    %v520 = vpow.pop %v519
    %v521 = vmul.f32 %v507, 1.442695
    %v522 = vpow.pop %v521
    %v523 = vmul.f32 %v508, 1.442695
    %v524 = vpow.pop %v523
    %v525 = vrot.slane %v510, 4
    %v526 = vadd.f32 %v510, %v525
    %v527 = vrot.slane %v526, 2
    %v528 = vadd.f32 %v526, %v527
    %v529 = vrot.slane %v528, 1
    %v530 = vadd.f32 %v528, %v529
    %v531 = vrot.slane %v512, 4
    %v532 = vadd.f32 %v512, %v531
    %v533 = vrot.slane %v532, 2
    %v534 = vadd.f32 %v532, %v533
    %v535 = vrot.slane %v534, 1
    %v536 = vadd.f32 %v534, %v535
    %v537 = vrot.slane %v514, 4
    %v538 = vadd.f32 %v514, %v537
    %v539 = vrot.slane %v538, 2
    %v540 = vadd.f32 %v538, %v539
    %v541 = vrot.slane %v540, 1
    %v542 = vadd.f32 %v540, %v541
    %v543 = vrot.slane %v516, 4
    %v544 = vadd.f32 %v516, %v543
    %v545 = vrot.slane %v544, 2
    %v546 = vadd.f32 %v544, %v545
    %v547 = vrot.slane %v546, 1
    %v548 = vadd.f32 %v546, %v547
    %v549 = vrot.slane %v518, 4
    %v550 = vadd.f32 %v518, %v549
    %v551 = vrot.slane %v550, 2
    %v552 = vadd.f32 %v550, %v551
    %v553 = vrot.slane %v552, 1
    %v554 = vadd.f32 %v552, %v553
    %v555 = vrot.slane %v520, 4
    %v556 = vadd.f32 %v520, %v555
    %v557 = vrot.slane %v556, 2
    %v558 = vadd.f32 %v556, %v557
    %v559 = vrot.slane %v558, 1
    %v560 = vadd.f32 %v558, %v559
    %v561 = vrot.slane %v522, 4
    %v562 = vadd.f32 %v522, %v561
    %v563 = vrot.slane %v562, 2
    %v564 = vadd.f32 %v562, %v563
    %v565 = vrot.slane %v564, 1
    %v566 = vadd.f32 %v564, %v565
    %v567 = vrot.slane %v524, 4
    %v568 = vadd.f32 %v524, %v567
    %v569 = vrot.slane %v568, 2
    %v570 = vadd.f32 %v568, %v569
    %v571 = vrot.slane %v570, 1
    %v572 = vadd.f32 %v570, %v571
    %v573 = vrcp.pop %v530
    %v574 = vrcp.pop %v536
    %v575 = vrcp.pop %v542
    %v576 = vrcp.pop %v548
    %v577 = vrcp.pop %v554
    %v578 = vrcp.pop %v560
    %v579 = vrcp.pop %v566
    %v580 = vrcp.pop %v572
    %v581 = vmul.f32 %v530, %v573
    %v582 = vmul.f32 %v536, %v574
    %v583 = vmul.f32 %v542, %v575
    %v584 = vmul.f32 %v548, %v576
    %v585 = vmul.f32 %v554, %v577
    %v586 = vmul.f32 %v560, %v578
    %v587 = vmul.f32 %v566, %v579
    %v588 = vmul.f32 %v572, %v580
    %v589 = vsub.f32 2.0, %v581
    %v590 = vsub.f32 2.0, %v582
    %v591 = vsub.f32 2.0, %v583
    %v592 = vsub.f32 2.0, %v584
    %v593 = vsub.f32 2.0, %v585
    %v594 = vsub.f32 2.0, %v586
    %v595 = vsub.f32 2.0, %v587
    %v596 = vsub.f32 2.0, %v588
    %v597 = vmul.f32 %v573, %v589
    %v598 = vmul.f32 %v574, %v590
    %v599 = vmul.f32 %v575, %v591
    %v600 = vmul.f32 %v576, %v592
    %v601 = vmul.f32 %v577, %v593
    %v602 = vmul.f32 %v578, %v594
    %v603 = vmul.f32 %v579, %v595
    %v604 = vmul.f32 %v580, %v596
    %v605 = vmul.f32 %v510, %v597
    %v606 = vmul.f32 %v512, %v598
    %v607 = vmul.f32 %v514, %v599
    %v608 = vmul.f32 %v516, %v600
    %v609 = vmul.f32 %v518, %v601
    %v610 = vmul.f32 %v520, %v602
    %v611 = vmul.f32 %v522, %v603
    %v612 = vmul.f32 %v524, %v604
    %v613 = vmul.f32 %v605, %v132
    %v614 = vmul.f32 %v606, %v132
    %v615 = vmul.f32 %v607, %v132
    %v616 = vmul.f32 %v608, %v132
    %v617 = vmul.f32 %v609, %v132
    %v618 = vmul.f32 %v610, %v132
    %v619 = vmul.f32 %v611, %v132
    %v620 = vmul.f32 %v612, %v132
    %v621 = vrot.slane %v613, 4
    %v622 = vadd.f32 %v613, %v621
    %v623 = vrot.slane %v622, 2
    %v624 = vadd.f32 %v622, %v623
    %v625 = vrot.slane %v624, 1
    %v626 = vadd.f32 %v624, %v625
    %v627 = vrot.slane %v614, 4
    %v628 = vadd.f32 %v614, %v627
    %v629 = vrot.slane %v628, 2
    %v630 = vadd.f32 %v628, %v629
    %v631 = vrot.slane %v630, 1
    %v632 = vadd.f32 %v630, %v631
    %v633 = vrot.slane %v615, 4
    %v634 = vadd.f32 %v615, %v633
    %v635 = vrot.slane %v634, 2
    %v636 = vadd.f32 %v634, %v635
    %v637 = vrot.slane %v636, 1
    %v638 = vadd.f32 %v636, %v637
    %v639 = vrot.slane %v616, 4
    %v640 = vadd.f32 %v616, %v639
    %v641 = vrot.slane %v640, 2
    %v642 = vadd.f32 %v640, %v641
    %v643 = vrot.slane %v642, 1
    %v644 = vadd.f32 %v642, %v643
    %v645 = vrot.slane %v617, 4
    %v646 = vadd.f32 %v617, %v645
    %v647 = vrot.slane %v646, 2
    %v648 = vadd.f32 %v646, %v647
    %v649 = vrot.slane %v648, 1
    %v650 = vadd.f32 %v648, %v649
    %v651 = vrot.slane %v618, 4
    %v652 = vadd.f32 %v618, %v651
    %v653 = vrot.slane %v652, 2
    %v654 = vadd.f32 %v652, %v653
    %v655 = vrot.slane %v654, 1
    %v656 = vadd.f32 %v654, %v655
    %v657 = vrot.slane %v619, 4
    %v658 = vadd.f32 %v619, %v657
    %v659 = vrot.slane %v658, 2
    %v660 = vadd.f32 %v658, %v659
    %v661 = vrot.slane %v660, 1
    %v662 = vadd.f32 %v660, %v661
    %v663 = vrot.slane %v620, 4
    %v664 = vadd.f32 %v620, %v663
    %v665 = vrot.slane %v664, 2
    %v666 = vadd.f32 %v664, %v665
    %v667 = vrot.slane %v666, 1
    %v668 = vadd.f32 %v666, %v667
    %v669 = vmul.f32 %v605, %v142
    %v670 = vmul.f32 %v606, %v142
    %v671 = vmul.f32 %v607, %v142
    %v672 = vmul.f32 %v608, %v142
    %v673 = vmul.f32 %v609, %v142
    %v674 = vmul.f32 %v610, %v142
    %v675 = vmul.f32 %v611, %v142
    %v676 = vmul.f32 %v612, %v142
    %v677 = vrot.slane %v669, 4
    %v678 = vadd.f32 %v669, %v677
    %v679 = vrot.slane %v678, 2
    %v680 = vadd.f32 %v678, %v679
    %v681 = vrot.slane %v680, 1
    %v682 = vadd.f32 %v680, %v681
    %v683 = vrot.slane %v670, 4
    %v684 = vadd.f32 %v670, %v683
    %v685 = vrot.slane %v684, 2
    %v686 = vadd.f32 %v684, %v685
    %v687 = vrot.slane %v686, 1
    %v688 = vadd.f32 %v686, %v687
    %v689 = vrot.slane %v671, 4
    %v690 = vadd.f32 %v671, %v689
    %v691 = vrot.slane %v690, 2
    %v692 = vadd.f32 %v690, %v691
    %v693 = vrot.slane %v692, 1
    %v694 = vadd.f32 %v692, %v693
    %v695 = vrot.slane %v672, 4
    %v696 = vadd.f32 %v672, %v695
    %v697 = vrot.slane %v696, 2
    %v698 = vadd.f32 %v696, %v697
    %v699 = vrot.slane %v698, 1
    %v700 = vadd.f32 %v698, %v699
    %v701 = vrot.slane %v673, 4
    %v702 = vadd.f32 %v673, %v701
    %v703 = vrot.slane %v702, 2
    %v704 = vadd.f32 %v702, %v703
    %v705 = vrot.slane %v704, 1
    %v706 = vadd.f32 %v704, %v705
    %v707 = vrot.slane %v674, 4
    %v708 = vadd.f32 %v674, %v707
    %v709 = vrot.slane %v708, 2
    %v710 = vadd.f32 %v708, %v709
    %v711 = vrot.slane %v710, 1
    %v712 = vadd.f32 %v710, %v711
    %v713 = vrot.slane %v675, 4
    %v714 = vadd.f32 %v675, %v713
    %v715 = vrot.slane %v714, 2
    %v716 = vadd.f32 %v714, %v715
    %v717 = vrot.slane %v716, 1
    %v718 = vadd.f32 %v716, %v717
    %v719 = vrot.slane %v676, 4
    %v720 = vadd.f32 %v676, %v719
    %v721 = vrot.slane %v720, 2
    %v722 = vadd.f32 %v720, %v721
    %v723 = vrot.slane %v722, 1
    %v724 = vadd.f32 %v722, %v723
    %s725 = sld [smem:[#allocation3 + $0x18]]
    %v726 = vstv %s725
    %v727 = vmul.f32 %v626, %v726
    %v728 = vmul.f32 %v632, %v726
    %v729 = vmul.f32 %v638, %v726
    %v730 = vmul.f32 %v644, %v726
    %v731 = vmul.f32 %v650, %v726
    %v732 = vmul.f32 %v656, %v726
    %v733 = vmul.f32 %v662, %v726
    %v734 = vmul.f32 %v668, %v726
    %s735 = sld [smem:[#allocation3 + $0x1a]]
    %v736 = vstv %s735
    %v737 = vmul.f32 %v682, %v736
    %v738 = vmul.f32 %v688, %v736
    %v739 = vmul.f32 %v694, %v736
    %v740 = vmul.f32 %v700, %v736
    %v741 = vmul.f32 %v706, %v736
    %v742 = vmul.f32 %v712, %v736
    %v743 = vmul.f32 %v718, %v736
    %v744 = vmul.f32 %v724, %v736
    %v745 = vadd.f32 %v727, %v737
    %v746 = vadd.f32 %v728, %v738
    %v747 = vadd.f32 %v729, %v739
    %v748 = vadd.f32 %v730, %v740
    %v749 = vadd.f32 %v731, %v741
    %v750 = vadd.f32 %v732, %v742
    %v751 = vadd.f32 %v733, %v743
    %v752 = vadd.f32 %v734, %v744
    %s753 = sld [smem:[#allocation3 + $0x1c]]
    %v754 = vstv %s753
    %v755 = vadd.f32 %v745, %v754
    %v756 = vadd.f32 %v746, %v754
    %v757 = vadd.f32 %v747, %v754
    %v758 = vadd.f32 %v748, %v754
    %v759 = vadd.f32 %v749, %v754
    %v760 = vadd.f32 %v750, %v754
    %v761 = vadd.f32 %v751, %v754
    %v762 = vadd.f32 %v752, %v754
    %s763 = sld [smem:[#allocation3 + $0x19]]
    %v764 = vstv %s763
    %v765 = vmul.f32 %v626, %v764
    %v766 = vmul.f32 %v632, %v764
    %v767 = vmul.f32 %v638, %v764
    %v768 = vmul.f32 %v644, %v764
    %v769 = vmul.f32 %v650, %v764
    %v770 = vmul.f32 %v656, %v764
    %v771 = vmul.f32 %v662, %v764
    %v772 = vmul.f32 %v668, %v764
    %s773 = sld [smem:[#allocation3 + $0x1b]]
    %v774 = vstv %s773
    %v775 = vmul.f32 %v682, %v774
    %v776 = vmul.f32 %v688, %v774
    %v777 = vmul.f32 %v694, %v774
    %v778 = vmul.f32 %v700, %v774
    %v779 = vmul.f32 %v706, %v774
    %v780 = vmul.f32 %v712, %v774
    %v781 = vmul.f32 %v718, %v774
    %v782 = vmul.f32 %v724, %v774
    %v783 = vadd.f32 %v765, %v775
    %v784 = vadd.f32 %v766, %v776
    %v785 = vadd.f32 %v767, %v777
    %v786 = vadd.f32 %v768, %v778
    %v787 = vadd.f32 %v769, %v779
    %v788 = vadd.f32 %v770, %v780
    %v789 = vadd.f32 %v771, %v781
    %v790 = vadd.f32 %v772, %v782
    %s791 = sld [smem:[#allocation3 + $0x1d]]
    %v792 = vstv %s791
    %v793 = vadd.f32 %v783, %v792
    %v794 = vadd.f32 %v784, %v792
    %v795 = vadd.f32 %v785, %v792
    %v796 = vadd.f32 %v786, %v792
    %v797 = vadd.f32 %v787, %v792
    %v798 = vadd.f32 %v788, %v792
    %v799 = vadd.f32 %v789, %v792
    %v800 = vadd.f32 %v790, %v792
    %vm809 = vcmask 1041409
    %v810 = vsel %vm809, %v756, %v755
    %vm811 = vcmask 1042434
    %v812 = vsel %vm811, %v757, %v810
    %vm813 = vcmask 1043459
    %v814 = vsel %vm813, %v758, %v812
    %vm815 = vcmask 1044484
    %v816 = vsel %vm815, %v759, %v814
    %vm817 = vcmask 1045509
    %v818 = vsel %vm817, %v760, %v816
    %vm819 = vcmask 1046534
    %v820 = vsel %vm819, %v761, %v818
    %vm821 = vcmask 1047559
    %v822 = vsel %vm821, %v762, %v820
    %v824 = vadd.f32 %v57, %v822
    %v833 = vsel %vm809, %v794, %v793
    %v834 = vsel %vm811, %v795, %v833
    %v835 = vsel %vm813, %v796, %v834
    %v836 = vsel %vm815, %v797, %v835
    %v837 = vsel %vm817, %v798, %v836
    %v838 = vsel %vm819, %v799, %v837
    %v839 = vsel %vm821, %v800, %v838
    %v841 = vadd.f32 %v67, %v839
    %v842 = vadd.f32 %v824, %v841
    %v843 = vmul.f32 %v842, 0.5
    %v844 = vsub.f32 %v824, %v843
    %v845 = vsub.f32 %v841, %v843
    %v846 = vmul.f32 %v844, %v844
    %v847 = vmul.f32 %v845, %v845
    %v848 = vadd.f32 %v846, %v847
    %v849 = vmul.f32 %v848, 0.5
    %v850 = vadd.f32 %v849, 1e-05
    %v851 = vrsqrt.pop %v850
    %v852 = vmul.f32 %v844, %v851
    %s853 = sld [smem:[#allocation3 + $0x1e]]
    %v854 = vstv %s853
    %v855 = vmul.f32 %v852, %v854
    %s856 = sld [smem:[#allocation3 + $0x20]]
    %v857 = vstv %s856
    %v858 = vadd.f32 %v855, %v857
    %v859 = vmul.f32 %v845, %v851
    %s860 = sld [smem:[#allocation3 + $0x1f]]
    %v861 = vstv %s860
    %v862 = vmul.f32 %v859, %v861
    %s863 = sld [smem:[#allocation3 + $0x21]]
    %v864 = vstv %s863
    %v865 = vadd.f32 %v862, %v864
    %s866 = sld [smem:[#allocation3 + $0x22]]
    %v867 = vstv %s866
    %v868 = vmul.f32 %v858, %v867
    %s869 = sld [smem:[#allocation3 + $0x2a]]
    %v870 = vstv %s869
    %v871 = vmul.f32 %v865, %v870
    %v872 = vadd.f32 %v868, %v871
    %s873 = sld [smem:[#allocation3 + $0x32]]
    %v874 = vstv %s873
    %v875 = vadd.f32 %v872, %v874
    %v876 = vmax.f32 %v875, 0.0
    %s877 = sld [smem:[#allocation3 + $0x3a]]
    %v878 = vstv %s877
    %v879 = vmul.f32 %v876, %v878
    %v880 = vadd.f32 %v879, 0.0
    %s881 = sld [smem:[#allocation3 + $0x3b]]
    %v882 = vstv %s881
    %v883 = vmul.f32 %v876, %v882
    %v884 = vadd.f32 %v883, 0.0
    %s885 = sld [smem:[#allocation3 + $0x23]]
    %v886 = vstv %s885
    %v887 = vmul.f32 %v858, %v886
    %s888 = sld [smem:[#allocation3 + $0x2b]]
    %v889 = vstv %s888
    %v890 = vmul.f32 %v865, %v889
    %v891 = vadd.f32 %v887, %v890
    %s892 = sld [smem:[#allocation3 + $0x33]]
    %v893 = vstv %s892
    %v894 = vadd.f32 %v891, %v893
    %v895 = vmax.f32 %v894, 0.0
    %s896 = sld [smem:[#allocation3 + $0x3c]]
    %v897 = vstv %s896
    %v898 = vmul.f32 %v895, %v897
    %v899 = vadd.f32 %v880, %v898
    %s900 = sld [smem:[#allocation3 + $0x3d]]
    %v901 = vstv %s900
    %v902 = vmul.f32 %v895, %v901
    %v903 = vadd.f32 %v884, %v902
    %s904 = sld [smem:[#allocation3 + $0x24]]
    %v905 = vstv %s904
    %v906 = vmul.f32 %v858, %v905
    %s907 = sld [smem:[#allocation3 + $0x2c]]
    %v908 = vstv %s907
    %v909 = vmul.f32 %v865, %v908
    %v910 = vadd.f32 %v906, %v909
    %s911 = sld [smem:[#allocation3 + $0x34]]
    %v912 = vstv %s911
    %v913 = vadd.f32 %v910, %v912
    %v914 = vmax.f32 %v913, 0.0
    %s915 = sld [smem:[#allocation3 + $0x3e]]
    %v916 = vstv %s915
    %v917 = vmul.f32 %v914, %v916
    %v918 = vadd.f32 %v899, %v917
    %s919 = sld [smem:[#allocation3 + $0x3f]]
    %v920 = vstv %s919
    %v921 = vmul.f32 %v914, %v920
    %v922 = vadd.f32 %v903, %v921
    %s923 = sld [smem:[#allocation3 + $0x25]]
    %v924 = vstv %s923
    %v925 = vmul.f32 %v858, %v924
    %s926 = sld [smem:[#allocation3 + $0x2d]]
    %v927 = vstv %s926
    %v928 = vmul.f32 %v865, %v927
    %v929 = vadd.f32 %v925, %v928
    %s930 = sld [smem:[#allocation3 + $0x35]]
    %v931 = vstv %s930
    %v932 = vadd.f32 %v929, %v931
    %v933 = vmax.f32 %v932, 0.0
    %s934 = sld [smem:[#allocation3 + $0x40]]
    %v935 = vstv %s934
    %v936 = vmul.f32 %v933, %v935
    %v937 = vadd.f32 %v918, %v936
    %s938 = sld [smem:[#allocation3 + $0x41]]
    %v939 = vstv %s938
    %v940 = vmul.f32 %v933, %v939
    %v941 = vadd.f32 %v922, %v940
    %s942 = sld [smem:[#allocation3 + $0x26]]
    %v943 = vstv %s942
    %v944 = vmul.f32 %v858, %v943
    %s945 = sld [smem:[#allocation3 + $0x2e]]
    %v946 = vstv %s945
    %v947 = vmul.f32 %v865, %v946
    %v948 = vadd.f32 %v944, %v947
    %s949 = sld [smem:[#allocation3 + $0x36]]
    %v950 = vstv %s949
    %v951 = vadd.f32 %v948, %v950
    %v952 = vmax.f32 %v951, 0.0
    %s953 = sld [smem:[#allocation3 + $0x42]]
    %v954 = vstv %s953
    %v955 = vmul.f32 %v952, %v954
    %v956 = vadd.f32 %v937, %v955
    %s957 = sld [smem:[#allocation3 + $0x43]]
    %v958 = vstv %s957
    %v959 = vmul.f32 %v952, %v958
    %v960 = vadd.f32 %v941, %v959
    %s961 = sld [smem:[#allocation3 + $0x27]]
    %v962 = vstv %s961
    %v963 = vmul.f32 %v858, %v962
    %s964 = sld [smem:[#allocation3 + $0x2f]]
    %v965 = vstv %s964
    %v966 = vmul.f32 %v865, %v965
    %v967 = vadd.f32 %v963, %v966
    %s968 = sld [smem:[#allocation3 + $0x37]]
    %v969 = vstv %s968
    %v970 = vadd.f32 %v967, %v969
    %v971 = vmax.f32 %v970, 0.0
    %s972 = sld [smem:[#allocation3 + $0x44]]
    %v973 = vstv %s972
    %v974 = vmul.f32 %v971, %v973
    %v975 = vadd.f32 %v956, %v974
    %s976 = sld [smem:[#allocation3 + $0x45]]
    %v977 = vstv %s976
    %v978 = vmul.f32 %v971, %v977
    %v979 = vadd.f32 %v960, %v978
    %s980 = sld [smem:[#allocation3 + $0x28]]
    %v981 = vstv %s980
    %v982 = vmul.f32 %v858, %v981
    %s983 = sld [smem:[#allocation3 + $0x30]]
    %v984 = vstv %s983
    %v985 = vmul.f32 %v865, %v984
    %v986 = vadd.f32 %v982, %v985
    %s987 = sld [smem:[#allocation3 + $0x38]]
    %v988 = vstv %s987
    %v989 = vadd.f32 %v986, %v988
    %v990 = vmax.f32 %v989, 0.0
    %s991 = sld [smem:[#allocation3 + $0x46]]
    %v992 = vstv %s991
    %v993 = vmul.f32 %v990, %v992
    %v994 = vadd.f32 %v975, %v993
    %s995 = sld [smem:[#allocation3 + $0x47]]
    %v996 = vstv %s995
    %v997 = vmul.f32 %v990, %v996
    %v998 = vadd.f32 %v979, %v997
    %s999 = sld [smem:[#allocation3 + $0x29]]
    %v1000 = vstv %s999
    %v1001 = vmul.f32 %v858, %v1000
    %s1002 = sld [smem:[#allocation3 + $0x31]]
    %v1003 = vstv %s1002
    %v1004 = vmul.f32 %v865, %v1003
    %v1005 = vadd.f32 %v1001, %v1004
    %s1006 = sld [smem:[#allocation3 + $0x39]]
    %v1007 = vstv %s1006
    %v1008 = vadd.f32 %v1005, %v1007
    %v1009 = vmax.f32 %v1008, 0.0
    %s1010 = sld [smem:[#allocation3 + $0x48]]
    %v1011 = vstv %s1010
    %v1012 = vmul.f32 %v1009, %v1011
    %v1013 = vadd.f32 %v994, %v1012
    %s1014 = sld [smem:[#allocation3 + $0x49]]
    %v1015 = vstv %s1014
    %v1016 = vmul.f32 %v1009, %v1015
    %v1017 = vadd.f32 %v998, %v1016
    %s1018 = sld [smem:[#allocation3 + $0x4a]]
    %v1019 = vstv %s1018
    %v1020 = vadd.f32 %v1013, %v1019
    %s1021 = sld [smem:[#allocation3 + $0x4b]]
    %v1022 = vstv %s1021
    %v1023 = vadd.f32 %v1017, %v1022
    %v1024 = vadd.f32 %v858, %v1020
    %v1025 = vadd.f32 %v865, %v1023
    %v1026 = vadd.f32 %v1024, %v1025
    %v1027 = vmul.f32 %v1026, 0.5
    %v1028 = vsub.f32 %v1024, %v1027
    %v1029 = vsub.f32 %v1025, %v1027
    %v1030 = vmul.f32 %v1028, %v1028
    %v1031 = vmul.f32 %v1029, %v1029
    %v1032 = vadd.f32 %v1030, %v1031
    %v1033 = vmul.f32 %v1032, 0.5
    %v1034 = vadd.f32 %v1033, 1e-05
    %v1035 = vrsqrt.pop %v1034
    %v1036 = vmul.f32 %v1028, %v1035
    %s1037 = sld [smem:[#allocation3 + $0x4c]]
    %v1038 = vstv %s1037
    %v1039 = vmul.f32 %v1036, %v1038
    %s1040 = sld [smem:[#allocation3 + $0x4e]]
    %v1041 = vstv %s1040
    %v1042 = vadd.f32 %v1039, %v1041
    %v1043 = vmul.f32 %v1029, %v1035
    %s1044 = sld [smem:[#allocation3 + $0x4d]]
    %v1045 = vstv %s1044
    %v1046 = vmul.f32 %v1043, %v1045
    %s1047 = sld [smem:[#allocation3 + $0x4f]]
    %v1048 = vstv %s1047
    %v1049 = vadd.f32 %v1046, %v1048
    %s1050 = sld [smem:[#allocation3 + $0x50]]
    %v1051 = vstv %s1050
    %v1052 = vmul.f32 %v1042, %v1051
    %s1053 = sld [smem:[#allocation3 + $0x59]]
    %v1054 = vstv %s1053
    %v1055 = vmul.f32 %v1049, %v1054
    %v1056 = vadd.f32 %v1052, %v1055
    %s1057 = sld [smem:[#allocation3 + $0x62]]
    %v1058 = vstv %s1057
    %v1059 = vadd.f32 %v1056, %v1058
    %1060 = vst [vmem:[#allocation9] sm:$0xff] %v1059
    %s1061 = sld [smem:[#allocation3 + $0x51]]
    %v1062 = vstv %s1061
    %v1063 = vmul.f32 %v1042, %v1062
    %s1064 = sld [smem:[#allocation3 + $0x5a]]
    %v1065 = vstv %s1064
    %v1066 = vmul.f32 %v1049, %v1065
    %v1067 = vadd.f32 %v1063, %v1066
    %s1068 = sld [smem:[#allocation3 + $0x63]]
    %v1069 = vstv %s1068
    %v1070 = vadd.f32 %v1067, %v1069
    %s1071 = scalar_lea.vmem [#allocation9], 8
    %1072 = vst [vmem:[%s1071] sm:$0xff] %v1070
    %s1073 = sld [smem:[#allocation3 + $0x52]]
    %v1074 = vstv %s1073
    %v1075 = vmul.f32 %v1042, %v1074
    %s1076 = sld [smem:[#allocation3 + $0x5b]]
    %v1077 = vstv %s1076
    %v1078 = vmul.f32 %v1049, %v1077
    %v1079 = vadd.f32 %v1075, %v1078
    %s1080 = sld [smem:[#allocation3 + $0x64]]
    %v1081 = vstv %s1080
    %v1082 = vadd.f32 %v1079, %v1081
    %s1083 = scalar_lea.vmem [#allocation9], 16
    %1084 = vst [vmem:[%s1083] sm:$0xff] %v1082
    %s1085 = sld [smem:[#allocation3 + $0x53]]
    %v1086 = vstv %s1085
    %v1087 = vmul.f32 %v1042, %v1086
    %s1088 = sld [smem:[#allocation3 + $0x5c]]
    %v1089 = vstv %s1088
    %v1090 = vmul.f32 %v1049, %v1089
    %v1091 = vadd.f32 %v1087, %v1090
    %s1092 = sld [smem:[#allocation3 + $0x65]]
    %v1093 = vstv %s1092
    %v1094 = vadd.f32 %v1091, %v1093
    %s1095 = scalar_lea.vmem [#allocation9], 24
    %1096 = vst [vmem:[%s1095] sm:$0xff] %v1094
    %s1097 = sld [smem:[#allocation3 + $0x54]]
    %v1098 = vstv %s1097
    %v1099 = vmul.f32 %v1042, %v1098
    %s1100 = sld [smem:[#allocation3 + $0x5d]]
    %v1101 = vstv %s1100
    %v1102 = vmul.f32 %v1049, %v1101
    %v1103 = vadd.f32 %v1099, %v1102
    %s1104 = sld [smem:[#allocation3 + $0x66]]
    %v1105 = vstv %s1104
    %v1106 = vadd.f32 %v1103, %v1105
    %s1107 = scalar_lea.vmem [#allocation9], 32
    %1108 = vst [vmem:[%s1107] sm:$0xff] %v1106
    %s1109 = sld [smem:[#allocation3 + $0x55]]
    %v1110 = vstv %s1109
    %v1111 = vmul.f32 %v1042, %v1110
    %s1112 = sld [smem:[#allocation3 + $0x5e]]
    %v1113 = vstv %s1112
    %v1114 = vmul.f32 %v1049, %v1113
    %v1115 = vadd.f32 %v1111, %v1114
    %s1116 = sld [smem:[#allocation3 + $0x67]]
    %v1117 = vstv %s1116
    %v1118 = vadd.f32 %v1115, %v1117
    %s1119 = scalar_lea.vmem [#allocation9], 40
    %1120 = vst [vmem:[%s1119] sm:$0xff] %v1118
    %s1121 = sld [smem:[#allocation3 + $0x56]]
    %v1122 = vstv %s1121
    %v1123 = vmul.f32 %v1042, %v1122
    %s1124 = sld [smem:[#allocation3 + $0x5f]]
    %v1125 = vstv %s1124
    %v1126 = vmul.f32 %v1049, %v1125
    %v1127 = vadd.f32 %v1123, %v1126
    %s1128 = sld [smem:[#allocation3 + $0x68]]
    %v1129 = vstv %s1128
    %v1130 = vadd.f32 %v1127, %v1129
    %s1131 = scalar_lea.vmem [#allocation9], 48
    %1132 = vst [vmem:[%s1131] sm:$0xff] %v1130
    %s1133 = sld [smem:[#allocation3 + $0x57]]
    %v1134 = vstv %s1133
    %v1135 = vmul.f32 %v1042, %v1134
    %s1136 = sld [smem:[#allocation3 + $0x60]]
    %v1137 = vstv %s1136
    %v1138 = vmul.f32 %v1049, %v1137
    %v1139 = vadd.f32 %v1135, %v1138
    %s1140 = sld [smem:[#allocation3 + $0x69]]
    %v1141 = vstv %s1140
    %v1142 = vadd.f32 %v1139, %v1141
    %s1143 = scalar_lea.vmem [#allocation9], 56
    %1144 = vst [vmem:[%s1143] sm:$0xff] %v1142
    %s1145 = sld [smem:[#allocation3 + $0x58]]
    %v1146 = vstv %s1145
    %v1147 = vmul.f32 %v1042, %v1146
    %s1148 = sld [smem:[#allocation3 + $0x61]]
    %v1149 = vstv %s1148
    %v1150 = vmul.f32 %v1049, %v1149
    %v1151 = vadd.f32 %v1147, %v1150
    %s1152 = sld [smem:[#allocation3 + $0x6a]]
    %v1153 = vstv %s1152
    %v1154 = vadd.f32 %v1151, %v1153
    %s1155 = scalar_lea.vmem [#allocation9], 64
    %1156 = vst [vmem:[%s1155] sm:$0xff] %v1154
    // Predicated region
    $region18: #{tpu_custom_call.1} parent=1 // pred_check
      _
    $region19: #{tpu_custom_call.1} parent=1 // pred_check_branch
      %1158 = sbr.rel (0) target = $region21
    $region20: #{tpu_custom_call.1} parent=1 // pred_region
      %s1160 = ssub.s32 1152, 1152
      %1161 = vsyncadd [#allocation6], %s1160
      %s1162 = sshll.u32 [#allocation9], 4
      %s1163 = int_to_ptr.vmem [resolvable:$true] %s1162
      %1168 = dma.vmem_to_hbm [thread:$0]  %s1163, 1152, %s3, [#allocation6], 128, 128, 8
    $region21: #{tpu_custom_call.1} parent=1 // pred_fallthru
      _
    // Predicated region
    $region22: #{tpu_custom_call.1} parent=1 // pred_check
      _
    $region23: #{tpu_custom_call.1} parent=1 // pred_check_branch
      %1170 = sbr.rel (0) target = $region25
    $region24: #{tpu_custom_call.1} parent=1 // pred_region
      %1171 = dma.done [#allocation6], 1152
    $region25: #{tpu_custom_call.1} parent=1 // pred_fallthru
      _
    %1172 = vsyncpa [#allocation5], 1
    %1173 = vsyncpa [#allocation8], 1
    %1174 = vsyncpa [#allocation6], 1

</llo_original>
